<compile_context>
chip_gen: v7x
topology: tpu7x:2x2x1
jax: 0.10.0
libtpu: 0.0.40
codegen_flags: <defaults>
</compile_context>

<pallas_src>
import functools

import jax
import jax.numpy as jnp
from jax.experimental import pallas as pl
from jax.experimental.pallas import tpu as pltpu


# -------------------------- Pallas kernel --------------------------

def _layernorm(v, gamma, beta, eps=1e-5):
    mu = jnp.mean(v, axis=-1, keepdims=True)
    var = jnp.mean((v - mu) ** 2, axis=-1, keepdims=True)
    return (v - mu) * jax.lax.rsqrt(var + eps) * gamma + beta


def transformer_block_kernel(
    x_ref,                       # (Rb, D_in)  compute dtype (bf16)
    wi_ref, bi_ref,              # input proj: (D_in, E) cdt, (1, E) f32
    g1_ref, be1_ref,             # layernorm1: (1, E) f32 x2
    wq_ref, bq_ref,              # per-head q: (H, E, hd) cdt (scale folded), (H, 1, hd) f32
    wk_ref, bk_ref,              # per-head k
    wv_ref, bv_ref,              # per-head v
    wo_ref, bo_ref,              # out-proj per head: (H, hd, E) cdt, (1, E) f32
    g2_ref, be2_ref,             # layernorm2: (1, E) f32 x2
    wc1_ref, bc1_ref,            # conv1 (1x1): (E, F1) cdt, (1, F1) f32
    wc2_ref, bc2_ref,            # conv2 (1x1): (F1, F2) cdt, (1, F2) f32
    o_ref,                       # (Rb, F2) f32, F2 == E
    *, num_heads, head_size, seqs_per_block, seq_len, kv_tile, exp_dtype,
):
    H, hd, bb, S = num_heads, head_size, seqs_per_block, seq_len
    E = H * hd
    Rb = bb * S
    G = H * bb
    f32 = jnp.float32
    cdt = x_ref.dtype

    x = x_ref[...]

    # ---- input projection (f32 accumulation) + layernorm1 (f32) ----
    proj = jnp.dot(x, wi_ref[...], preferred_element_type=f32) + bi_ref[...]
    h1 = _layernorm(proj, g1_ref[...], be1_ref[...]).astype(cdt)

    # ---- q/k/v, already head-batched via weight-side head split ----
    # Per-head (Rb, E) @ (E, hd) matmuls (E-deep contraction); results are joined
    # along the leading (major) axis -> no lane slices / lane concats on activations.
    def head_proj(w_ref, b_ref):
        per_head = [jnp.dot(h1, w_ref[h], preferred_element_type=f32) for h in range(H)]
        t = jnp.concatenate(per_head, axis=0).reshape(H, Rb, hd) + b_ref[...]
        return t.reshape(G, S, hd).astype(cdt)           # group index g = h * bb + b

    qg = head_proj(wq_ref, bq_ref)    # 1/sqrt(hd) already folded into wq/bq
    kg = head_proj(wk_ref, bk_ref)
    vg = head_proj(wv_ref, bv_ref)

    # ---- head-batched attention, KV-tiled flash-style online softmax ----
    n_kv = S // kv_tile
    if n_kv == 1:
        s = jnp.einsum("gqd,gkd->gqk", qg, kg, preferred_element_type=f32)
        m = jnp.max(s, axis=-1, keepdims=True)
        p = jnp.exp((s - m).astype(exp_dtype))            # bf16 on v6e/v7x, f32 on v5e
        l = jnp.sum(p.astype(f32), axis=-1, keepdims=True)
        acc = jnp.einsum("gqk,gkd->gqd", p.astype(cdt), vg, preferred_element_type=f32)
    else:
        m = jnp.full((G, S, 1), -jnp.inf, f32)
        l = jnp.zeros((G, S, 1), f32)
        acc = jnp.zeros((G, S, hd), f32)
        for t in range(n_kv):                             # static unroll; kv_tile % 8 == 0
            kt = kg[:, t * kv_tile:(t + 1) * kv_tile, :]
            vt = vg[:, t * kv_tile:(t + 1) * kv_tile, :]
            s = jnp.einsum("gqd,gkd->gqk", qg, kt, preferred_element_type=f32)
            m_new = jnp.maximum(m, jnp.max(s, axis=-1, keepdims=True))
            alpha = jnp.exp(m - m_new)
            p = jnp.exp((s - m_new).astype(exp_dtype))
            l = alpha * l + jnp.sum(p.astype(f32), axis=-1, keepdims=True)
            acc = alpha * acc + jnp.einsum("gqk,gkd->gqd", p.astype(cdt), vt,
                                           preferred_element_type=f32)
            m = m_new
    # Normalize after the PV matmul (G*S*hd elements instead of G*S*S).
    ag = acc * pl.reciprocal(l, approx=True)

    # ---- output projection per head, summed (== concat(heads) @ Wo, exact) ----
    ah = ag.reshape(H, Rb, hd).astype(cdt)                # leading-dims reshape (free)
    attn = (jnp.einsum("hnd,hde->hne", ah, wo_ref[...],
                       preferred_element_type=f32).sum(axis=0) + bo_ref[...])

    # ---- residual 1 (dropout1 identity at eval), layernorm2, FFN ----
    res = attn + proj
    h2 = _layernorm(res, g2_ref[...], be2_ref[...]).astype(cdt)
    ff = jnp.dot(h2, wc1_ref[...], preferred_element_type=f32) + bc1_ref[...]
    ff = jnp.maximum(ff, 0.0).astype(cdt)                 # ReLU; dropout2 identity
    out = jnp.dot(ff, wc2_ref[...], preferred_element_type=f32) + bc2_ref[...]

    # ---- residual 2, single contiguous store ----
    # TODO(synk): F2 (= embed_dim = 32 here) < 128 forces masked partial stores;
    # lane-dense output needs the module's ff_dim2 / embed_dim to be >= 128.
    o_ref[...] = (out + res).astype(o_ref.dtype)


# -------------------------- parameter preparation (hoisted out of hot path) ----

def prepare_params(params, *, num_heads, head_size, compute_dtype=jnp.bfloat16):
    """One-time folding: 1/sqrt(hd) into q weights/bias, per-head weight slabs,
    bf16 casts for matmul operands.  Biases / LN params stay f32."""
    H, hd = num_heads, head_size
    E = H * hd
    scale = 1.0 / (hd ** 0.5)
    c = compute_dtype
    wqkv, bqkv = params["wqkv"], params["bqkv"]

    def per_head_w(w):   # (E, E) -> (H, E, hd)
        return w.reshape(E, H, hd).transpose(1, 0, 2)

    def per_head_b(b):   # (1, E) -> (H, 1, hd)
        return b.reshape(1, H, hd).transpose(1, 0, 2)

    wq, wk, wv = wqkv[:, :E], wqkv[:, E:2 * E], wqkv[:, 2 * E:]
    bq, bk, bv = bqkv[:, :E], bqkv[:, E:2 * E], bqkv[:, 2 * E:]
    return {
        "wi": params["wi"].astype(c), "bi": params["bi"],
        "g1": params["g1"], "be1": params["be1"],
        "wq_h": (per_head_w(wq) * scale).astype(c), "bq_h": per_head_b(bq) * scale,
        "wk_h": per_head_w(wk).astype(c), "bk_h": per_head_b(bk),
        "wv_h": per_head_w(wv).astype(c), "bv_h": per_head_b(bv),
        "wo_h": params["wo"].reshape(H, hd, E).astype(c), "bo": params["bo"],
        "g2": params["g2"], "be2": params["be2"],
        "wc1": params["wc1"].astype(c), "bc1": params["bc1"],
        "wc2": params["wc2"].astype(c), "bc2": params["bc2"],
    }


# -------------------------- wrapper --------------------------

def _softmax_exp_dtype():
    try:
        kind = jax.devices()[0].device_kind.lower()
    except Exception:
        return jnp.float32
    if "v6" in kind or "v7" in kind or "7x" in kind:
        return jnp.bfloat16          # bf16 EUP/VPU on v6e / v7x
    return jnp.float32               # v5e and older: keep vector/transcendental math f32


def transformer_block(x, prepared, *, num_heads, head_size,
                      seqs_per_block=None, kv_tile=None,
                      compute_dtype=jnp.bfloat16):
    """x: (B, S, F, C) or (B, S, D_in) float32. Returns (B, S, ff_dim2) float32."""
    if x.ndim == 4:
        B, S, F, C = x.shape
        x = x.reshape(B, S, F * C)
    B, S, D_in = x.shape
    H, hd = num_heads, head_size
    E = H * hd
    F1 = prepared["wc1"].shape[1]
    F2 = prepared["wc2"].shape[1]
    assert F2 == E, "ff_dim2 must equal embed_dim for the final residual add"
    N = B * S

    # Sequences per grid step: target ~512 token rows per block, must divide B
    # (attention spans a whole sequence).  v7x (64 MiB VMEM) naturally gets a
    # smaller block via the vmem estimate below.
    if seqs_per_block is None:
        bb = max(1, min(B, 512 // max(S, 1)))
        while B % bb:
            bb -= 1
    else:
        bb = seqs_per_block
    assert B % bb == 0
    Rb = bb * S

    # KV tile for the flash-style attention loop (decouples VMEM from S^2).
    if kv_tile is None:
        kv_tile = S if S <= 512 else 512
    assert S % kv_tile == 0 and (kv_tile == S or kv_tile % 8 == 0)

    exp_dtype = _softmax_exp_dtype()
    x2 = x.reshape(N, D_in).astype(compute_dtype)

    weight_args = (
        prepared["wi"], prepared["bi"],
        prepared["g1"], prepared["be1"],
        prepared["wq_h"], prepared["bq_h"],
        prepared["wk_h"], prepared["bk_h"],
        prepared["wv_h"], prepared["bv_h"],
        prepared["wo_h"], prepared["bo"],
        prepared["g2"], prepared["be2"],
        prepared["wc1"], prepared["bc1"],
        prepared["wc2"], prepared["bc2"],
    )

    # Weights: full-array blocks with constant index_map -> DMA'd once and kept
    # VMEM-resident across the whole grid (no re-fetch, no double-buffering).
    def resident_spec(arr):
        nd = arr.ndim
        return pl.BlockSpec(arr.shape, lambda i, _nd=nd: (0,) * _nd)

    in_specs = [pl.BlockSpec((Rb, D_in), lambda i: (i, 0))]
    in_specs += [resident_spec(a) for a in weight_args]
    out_spec = pl.BlockSpec((Rb, F2), lambda i: (i, 0))

    # ---- explicit scoped-VMEM budget derived from the chosen block sizes ----
    cb = jnp.dtype(compute_dtype).itemsize
    G = H * bb
    weight_bytes = sum(int(a.size) * a.dtype.itemsize for a in weight_args)
    io_bytes = 2 * (Rb * D_in * cb + Rb * F2 * 4)             # double-buffered row blocks
    act_bytes = Rb * (6 * E + F1 + F2) * 4 + Rb * (E + F1) * cb
    qkv_bytes = 3 * G * S * hd * (4 + cb)
    attn_bytes = G * S * (2 * kv_tile * 4 + hd * 4 + 8)
    est = weight_bytes + io_bytes + act_bytes + qkv_bytes + attn_bytes
    vmem_limit = int(min(max(2 * est + (8 << 20), 32 << 20), 64 << 20))  # cap: v7x physical

    kernel = functools.partial(
        transformer_block_kernel,
        num_heads=H, head_size=hd, seqs_per_block=bb, seq_len=S,
        kv_tile=kv_tile, exp_dtype=exp_dtype)

    out2 = pl.pallas_call(
        kernel,
        out_shape=jax.ShapeDtypeStruct((N, F2), jnp.float32),
        grid_spec=pltpu.PrefetchScalarGridSpec(
            num_scalar_prefetch=0,
            grid=(B // bb,),
            in_specs=in_specs,
            out_specs=out_spec),
        compiler_params=pltpu.CompilerParams(
            dimension_semantics=("parallel",),    # v7x: 2 TCs split the row blocks
            vmem_limit_bytes=vmem_limit),
    )(x2, *weight_args)
    return out2.reshape(B, S, F2)


# -------------------------- pure-JAX reference --------------------------

def transformer_block_ref(x, params, *, num_heads, head_size):
    if x.ndim == 4:
        B, S, F, C = x.shape
        x = x.reshape(B, S, F * C)
    E = num_heads * head_size

    def ln(v, g, b, eps=1e-5):
        mu = v.mean(-1, keepdims=True)
        var = ((v - mu) ** 2).mean(-1, keepdims=True)
        return (v - mu) / jnp.sqrt(var + eps) * g + b

    proj = x @ params["wi"] + params["bi"]
    h = ln(proj, params["g1"], params["be1"])
    qkv = h @ params["wqkv"] + params["bqkv"]
    q, k, v = qkv[..., :E], qkv[..., E:2 * E], qkv[..., 2 * E:]
    B, S, _ = q.shape
    qh = q.reshape(B, S, num_heads, head_size).transpose(0, 2, 1, 3)
    kh = k.reshape(B, S, num_heads, head_size).transpose(0, 2, 1, 3)
    vh = v.reshape(B, S, num_heads, head_size).transpose(0, 2, 1, 3)
    s = (qh / (head_size ** 0.5)) @ kh.transpose(0, 1, 3, 2)
    p = jax.nn.softmax(s, axis=-1)
    a = (p @ vh).transpose(0, 2, 1, 3).reshape(B, S, E)
    attn_out = a @ params["wo"] + params["bo"]
    res = attn_out + proj
    h2 = ln(res, params["g2"], params["be2"])
    ff = jax.nn.relu(h2 @ params["wc1"] + params["bc1"])
    out = ff @ params["wc2"] + params["bc2"]
    return out + res


# -------------------------- parameter init --------------------------

def init_params(key, *, d_in, head_size, num_heads, ff_dim, ff_dim2):
    E = head_size * num_heads
    ks = jax.random.split(key, 8)

    def w(k, shape, scale):
        return jax.random.normal(k, shape, jnp.float32) * scale

    return {
        "wi": w(ks[0], (d_in, E), 0.05),
        "bi": w(ks[1], (1, E), 0.01),
        "g1": jnp.ones((1, E), jnp.float32),
        "be1": jnp.zeros((1, E), jnp.float32),
        "wqkv": w(ks[2], (E, 3 * E), 0.05),
        "bqkv": w(ks[3], (1, 3 * E), 0.01),
        "wo": w(ks[4], (E, E), 0.05),
        "bo": w(ks[5], (1, E), 0.01),
        "g2": jnp.ones((1, E), jnp.float32),
        "be2": jnp.zeros((1, E), jnp.float32),
        "wc1": w(ks[6], (E, ff_dim), 0.05),
        "bc1": jnp.zeros((1, ff_dim), jnp.float32),
        "wc2": w(ks[7], (ff_dim, ff_dim2), 0.05),
        "bc2": jnp.zeros((1, ff_dim2), jnp.float32),
    }


# -------------------------- main --------------------------

if __name__ == "__main__":
    head_size, num_heads = 8, 4          # embed_dim = 32
    ff_dim, ff_dim2 = 64, 32             # ff_dim2 must equal embed_dim (residual add)
    B, S, F, C = 2, 8, 4, 4              # input (B, S, F, C) -> flattened D_in = 16

    key = jax.random.PRNGKey(0)
    kx, kp = jax.random.split(key)
    x = jax.random.normal(kx, (B, S, F, C), jnp.float32)

    params = init_params(kp, d_in=F * C, head_size=head_size, num_heads=num_heads,
                         ff_dim=ff_dim, ff_dim2=ff_dim2)
    prepared = prepare_params(params, num_heads=num_heads, head_size=head_size)

    # seqs_per_block=1 -> grid=(2,) so the row-blocked pipeline + resident-weight
    # path is actually exercised at this toy size.
    out = transformer_block(x, prepared, num_heads=num_heads, head_size=head_size,
                            seqs_per_block=1)
    out = jax.block_until_ready(out)

    ref = transformer_block_ref(x, params, num_heads=num_heads, head_size=head_size)
    assert out.shape == (B, S, ff_dim2)
    # Tolerance covers bf16 matmul operands / bf16 softmax exp (f32 accumulation);
    # structural errors would be O(0.1) and still caught.
    assert jnp.allclose(out, ref, rtol=2e-2, atol=2e-2), "mismatch vs JAX reference"

    print("KERNEL_OK")
</pallas_src>

<mosaic_0001>
module attributes {stable_mosaic.version = 11 : i64} {
  func.func @transformer_block_kernel(%arg0: i32, %arg1: memref<8x16xbf16, #tpu.memory_space<vmem>>, %arg2: memref<16x32xbf16, #tpu.memory_space<vmem>>, %arg3: memref<1x32xf32, #tpu.memory_space<vmem>>, %arg4: memref<1x32xf32, #tpu.memory_space<vmem>>, %arg5: memref<1x32xf32, #tpu.memory_space<vmem>>, %arg6: memref<4x32x8xbf16, #tpu.memory_space<vmem>>, %arg7: memref<4x1x8xf32, #tpu.memory_space<vmem>>, %arg8: memref<4x32x8xbf16, #tpu.memory_space<vmem>>, %arg9: memref<4x1x8xf32, #tpu.memory_space<vmem>>, %arg10: memref<4x32x8xbf16, #tpu.memory_space<vmem>>, %arg11: memref<4x1x8xf32, #tpu.memory_space<vmem>>, %arg12: memref<4x8x32xbf16, #tpu.memory_space<vmem>>, %arg13: memref<1x32xf32, #tpu.memory_space<vmem>>, %arg14: memref<1x32xf32, #tpu.memory_space<vmem>>, %arg15: memref<1x32xf32, #tpu.memory_space<vmem>>, %arg16: memref<32x64xbf16, #tpu.memory_space<vmem>>, %arg17: memref<1x64xf32, #tpu.memory_space<vmem>>, %arg18: memref<64x32xbf16, #tpu.memory_space<vmem>>, %arg19: memref<1x32xf32, #tpu.memory_space<vmem>>, %arg20: memref<8x32xf32, #tpu.memory_space<vmem>>) attributes {dimension_semantics = [#tpu.dimension_semantics<parallel>], iteration_bounds = array<i64: 2>, scalar_prefetch = 0 : i64, scratch_operands = 0 : i64, tpu.core_type = #tpu.core_type<tc>, window_params = [{transform_indices = @transform_0, window_bounds = array<i64: 8, 16>}, {pipeline_mode = #tpu.pipeline_mode<synchronous>, transform_indices = @transform_1, window_bounds = array<i64: 16, 32>}, {pipeline_mode = #tpu.pipeline_mode<synchronous>, transform_indices = @transform_2, window_bounds = array<i64: 1, 32>}, {pipeline_mode = #tpu.pipeline_mode<synchronous>, transform_indices = @transform_3, window_bounds = array<i64: 1, 32>}, {pipeline_mode = #tpu.pipeline_mode<synchronous>, transform_indices = @transform_4, window_bounds = array<i64: 1, 32>}, {pipeline_mode = #tpu.pipeline_mode<synchronous>, transform_indices = @transform_5, window_bounds = array<i64: 4, 32, 8>}, {pipeline_mode = #tpu.pipeline_mode<synchronous>, transform_indices = @transform_6, window_bounds = array<i64: 4, 1, 8>}, {pipeline_mode = #tpu.pipeline_mode<synchronous>, transform_indices = @transform_7, window_bounds = array<i64: 4, 32, 8>}, {pipeline_mode = #tpu.pipeline_mode<synchronous>, transform_indices = @transform_8, window_bounds = array<i64: 4, 1, 8>}, {pipeline_mode = #tpu.pipeline_mode<synchronous>, transform_indices = @transform_9, window_bounds = array<i64: 4, 32, 8>}, {pipeline_mode = #tpu.pipeline_mode<synchronous>, transform_indices = @transform_10, window_bounds = array<i64: 4, 1, 8>}, {pipeline_mode = #tpu.pipeline_mode<synchronous>, transform_indices = @transform_11, window_bounds = array<i64: 4, 8, 32>}, {pipeline_mode = #tpu.pipeline_mode<synchronous>, transform_indices = @transform_12, window_bounds = array<i64: 1, 32>}, {pipeline_mode = #tpu.pipeline_mode<synchronous>, transform_indices = @transform_13, window_bounds = array<i64: 1, 32>}, {pipeline_mode = #tpu.pipeline_mode<synchronous>, transform_indices = @transform_14, window_bounds = array<i64: 1, 32>}, {pipeline_mode = #tpu.pipeline_mode<synchronous>, transform_indices = @transform_15, window_bounds = array<i64: 32, 64>}, {pipeline_mode = #tpu.pipeline_mode<synchronous>, transform_indices = @transform_16, window_bounds = array<i64: 1, 64>}, {pipeline_mode = #tpu.pipeline_mode<synchronous>, transform_indices = @transform_17, window_bounds = array<i64: 64, 32>}, {pipeline_mode = #tpu.pipeline_mode<synchronous>, transform_indices = @transform_18, window_bounds = array<i64: 1, 32>}, {transform_indices = @transform_19, window_bounds = array<i64: 8, 32>}]} {
    %c0 = arith.constant 0 : index
    %c0_0 = arith.constant 0 : index
    %0 = vector.load %arg1[%c0, %c0_0] : memref<8x16xbf16, #tpu.memory_space<vmem>>, vector<8x16xbf16>
    %c0_1 = arith.constant 0 : index
    %c0_2 = arith.constant 0 : index
    %1 = vector.load %arg2[%c0_1, %c0_2] : memref<16x32xbf16, #tpu.memory_space<vmem>>, vector<16x32xbf16>
    %cst = arith.constant dense<0.000000e+00> : vector<8x32xf32>
    %2 = tpu.matmul %0, %1, %cst {dimension_numbers = #tpu.dot_dimension_numbers<[1], [0], [0], [1], [0, 0, 1, 1], [], []>} : vector<8x16xbf16>, vector<16x32xbf16>, vector<8x32xf32> -> vector<8x32xf32>
    %c0_3 = arith.constant 0 : index
    %c0_4 = arith.constant 0 : index
    %3 = vector.load %arg3[%c0_3, %c0_4] : memref<1x32xf32, #tpu.memory_space<vmem>>, vector<1x32xf32>
    %4 = vector.broadcast %3 : vector<1x32xf32> to vector<8x32xf32>
    %5 = arith.addf %2, %4 : vector<8x32xf32>
    %c0_5 = arith.constant 0 : index
    %c0_6 = arith.constant 0 : index
    %6 = vector.load %arg4[%c0_5, %c0_6] : memref<1x32xf32, #tpu.memory_space<vmem>>, vector<1x32xf32>
    %c0_7 = arith.constant 0 : index
    %c0_8 = arith.constant 0 : index
    %7 = vector.load %arg5[%c0_7, %c0_8] : memref<1x32xf32, #tpu.memory_space<vmem>>, vector<1x32xf32>
    %cst_9 = arith.constant dense<0.000000e+00> : vector<8xf32>
    %8 = vector.multi_reduction <add>, %5, %cst_9 [1] : vector<8x32xf32> to vector<8xf32>
    %9 = vector.shape_cast %8 : vector<8xf32> to vector<8x1xf32>
    %cst_10 = arith.constant 3.200000e+01 : f32
    %10 = vector.broadcast %cst_10 : f32 to vector<8x1xf32>
    %11 = arith.divf %9, %10 : vector<8x1xf32>
    %12 = vector.broadcast %11 : vector<8x1xf32> to vector<8x32xf32>
    %13 = arith.subf %5, %12 : vector<8x32xf32>
    %14 = arith.mulf %13, %13 : vector<8x32xf32>
    %cst_11 = arith.constant dense<0.000000e+00> : vector<8xf32>
    %15 = vector.multi_reduction <add>, %14, %cst_11 [1] : vector<8x32xf32> to vector<8xf32>
    %16 = vector.shape_cast %15 : vector<8xf32> to vector<8x1xf32>
    %cst_12 = arith.constant 3.200000e+01 : f32
    %17 = vector.broadcast %cst_12 : f32 to vector<8x1xf32>
    %18 = arith.divf %16, %17 : vector<8x1xf32>
    %19 = vector.broadcast %11 : vector<8x1xf32> to vector<8x32xf32>
    %20 = arith.subf %5, %19 : vector<8x32xf32>
    %cst_13 = arith.constant 9.99999974E-6 : f32
    %21 = vector.broadcast %cst_13 : f32 to vector<8x1xf32>
    %22 = arith.addf %18, %21 : vector<8x1xf32>
    %23 = math.rsqrt %22 : vector<8x1xf32>
    %24 = vector.broadcast %23 : vector<8x1xf32> to vector<8x32xf32>
    %25 = arith.mulf %20, %24 : vector<8x32xf32>
    %26 = vector.broadcast %6 : vector<1x32xf32> to vector<8x32xf32>
    %27 = arith.mulf %25, %26 : vector<8x32xf32>
    %28 = vector.broadcast %7 : vector<1x32xf32> to vector<8x32xf32>
    %29 = arith.addf %27, %28 : vector<8x32xf32>
    %30 = arith.truncf %29 : vector<8x32xf32> to vector<8x32xbf16>
    %c0_14 = arith.constant 0 : index
    %c0_15 = arith.constant 0 : index
    %c0_16 = arith.constant 0 : index
    %31 = vector.load %arg6[%c0_14, %c0_15, %c0_16] : memref<4x32x8xbf16, #tpu.memory_space<vmem>>, vector<1x32x8xbf16>
    %32 = vector.shape_cast %31 : vector<1x32x8xbf16> to vector<32x8xbf16>
    %cst_17 = arith.constant dense<0.000000e+00> : vector<8x8xf32>
    %33 = tpu.matmul %30, %32, %cst_17 {dimension_numbers = #tpu.dot_dimension_numbers<[1], [0], [0], [1], [0, 0, 1, 1], [], []>} : vector<8x32xbf16>, vector<32x8xbf16>, vector<8x8xf32> -> vector<8x8xf32>
    %c1 = arith.constant 1 : index
    %c0_18 = arith.constant 0 : index
    %c0_19 = arith.constant 0 : index
    %34 = vector.load %arg6[%c1, %c0_18, %c0_19] : memref<4x32x8xbf16, #tpu.memory_space<vmem>>, vector<1x32x8xbf16>
    %35 = vector.shape_cast %34 : vector<1x32x8xbf16> to vector<32x8xbf16>
    %cst_20 = arith.constant dense<0.000000e+00> : vector<8x8xf32>
    %36 = tpu.matmul %30, %35, %cst_20 {dimension_numbers = #tpu.dot_dimension_numbers<[1], [0], [0], [1], [0, 0, 1, 1], [], []>} : vector<8x32xbf16>, vector<32x8xbf16>, vector<8x8xf32> -> vector<8x8xf32>
    %c2 = arith.constant 2 : index
    %c0_21 = arith.constant 0 : index
    %c0_22 = arith.constant 0 : index
    %37 = vector.load %arg6[%c2, %c0_21, %c0_22] : memref<4x32x8xbf16, #tpu.memory_space<vmem>>, vector<1x32x8xbf16>
    %38 = vector.shape_cast %37 : vector<1x32x8xbf16> to vector<32x8xbf16>
    %cst_23 = arith.constant dense<0.000000e+00> : vector<8x8xf32>
    %39 = tpu.matmul %30, %38, %cst_23 {dimension_numbers = #tpu.dot_dimension_numbers<[1], [0], [0], [1], [0, 0, 1, 1], [], []>} : vector<8x32xbf16>, vector<32x8xbf16>, vector<8x8xf32> -> vector<8x8xf32>
    %c3 = arith.constant 3 : index
    %c0_24 = arith.constant 0 : index
    %c0_25 = arith.constant 0 : index
    %40 = vector.load %arg6[%c3, %c0_24, %c0_25] : memref<4x32x8xbf16, #tpu.memory_space<vmem>>, vector<1x32x8xbf16>
    %41 = vector.shape_cast %40 : vector<1x32x8xbf16> to vector<32x8xbf16>
    %cst_26 = arith.constant dense<0.000000e+00> : vector<8x8xf32>
    %42 = tpu.matmul %30, %41, %cst_26 {dimension_numbers = #tpu.dot_dimension_numbers<[1], [0], [0], [1], [0, 0, 1, 1], [], []>} : vector<8x32xbf16>, vector<32x8xbf16>, vector<8x8xf32> -> vector<8x8xf32>
    %43 = tpu.concatenate %33, %36, %39, %42 in 0 : vector<8x8xf32>, vector<8x8xf32>, vector<8x8xf32>, vector<8x8xf32> -> vector<32x8xf32>
    %44 = vector.shape_cast %43 : vector<32x8xf32> to vector<4x8x8xf32>
    %c0_27 = arith.constant 0 : index
    %c0_28 = arith.constant 0 : index
    %c0_29 = arith.constant 0 : index
    %45 = vector.load %arg7[%c0_27, %c0_28, %c0_29] : memref<4x1x8xf32, #tpu.memory_space<vmem>>, vector<4x1x8xf32>
    %46 = vector.broadcast %45 : vector<4x1x8xf32> to vector<4x8x8xf32>
    %47 = arith.addf %44, %46 : vector<4x8x8xf32>
    %48 = arith.truncf %47 : vector<4x8x8xf32> to vector<4x8x8xbf16>
    %c0_30 = arith.constant 0 : index
    %c0_31 = arith.constant 0 : index
    %c0_32 = arith.constant 0 : index
    %49 = vector.load %arg8[%c0_30, %c0_31, %c0_32] : memref<4x32x8xbf16, #tpu.memory_space<vmem>>, vector<1x32x8xbf16>
    %50 = vector.shape_cast %49 : vector<1x32x8xbf16> to vector<32x8xbf16>
    %cst_33 = arith.constant dense<0.000000e+00> : vector<8x8xf32>
    %51 = tpu.matmul %30, %50, %cst_33 {dimension_numbers = #tpu.dot_dimension_numbers<[1], [0], [0], [1], [0, 0, 1, 1], [], []>} : vector<8x32xbf16>, vector<32x8xbf16>, vector<8x8xf32> -> vector<8x8xf32>
    %c1_34 = arith.constant 1 : index
    %c0_35 = arith.constant 0 : index
    %c0_36 = arith.constant 0 : index
    %52 = vector.load %arg8[%c1_34, %c0_35, %c0_36] : memref<4x32x8xbf16, #tpu.memory_space<vmem>>, vector<1x32x8xbf16>
    %53 = vector.shape_cast %52 : vector<1x32x8xbf16> to vector<32x8xbf16>
    %cst_37 = arith.constant dense<0.000000e+00> : vector<8x8xf32>
    %54 = tpu.matmul %30, %53, %cst_37 {dimension_numbers = #tpu.dot_dimension_numbers<[1], [0], [0], [1], [0, 0, 1, 1], [], []>} : vector<8x32xbf16>, vector<32x8xbf16>, vector<8x8xf32> -> vector<8x8xf32>
    %c2_38 = arith.constant 2 : index
    %c0_39 = arith.constant 0 : index
    %c0_40 = arith.constant 0 : index
    %55 = vector.load %arg8[%c2_38, %c0_39, %c0_40] : memref<4x32x8xbf16, #tpu.memory_space<vmem>>, vector<1x32x8xbf16>
    %56 = vector.shape_cast %55 : vector<1x32x8xbf16> to vector<32x8xbf16>
    %cst_41 = arith.constant dense<0.000000e+00> : vector<8x8xf32>
    %57 = tpu.matmul %30, %56, %cst_41 {dimension_numbers = #tpu.dot_dimension_numbers<[1], [0], [0], [1], [0, 0, 1, 1], [], []>} : vector<8x32xbf16>, vector<32x8xbf16>, vector<8x8xf32> -> vector<8x8xf32>
    %c3_42 = arith.constant 3 : index
    %c0_43 = arith.constant 0 : index
    %c0_44 = arith.constant 0 : index
    %58 = vector.load %arg8[%c3_42, %c0_43, %c0_44] : memref<4x32x8xbf16, #tpu.memory_space<vmem>>, vector<1x32x8xbf16>
    %59 = vector.shape_cast %58 : vector<1x32x8xbf16> to vector<32x8xbf16>
    %cst_45 = arith.constant dense<0.000000e+00> : vector<8x8xf32>
    %60 = tpu.matmul %30, %59, %cst_45 {dimension_numbers = #tpu.dot_dimension_numbers<[1], [0], [0], [1], [0, 0, 1, 1], [], []>} : vector<8x32xbf16>, vector<32x8xbf16>, vector<8x8xf32> -> vector<8x8xf32>
    %61 = tpu.concatenate %51, %54, %57, %60 in 0 : vector<8x8xf32>, vector<8x8xf32>, vector<8x8xf32>, vector<8x8xf32> -> vector<32x8xf32>
    %62 = vector.shape_cast %61 : vector<32x8xf32> to vector<4x8x8xf32>
    %c0_46 = arith.constant 0 : index
    %c0_47 = arith.constant 0 : index
    %c0_48 = arith.constant 0 : index
    %63 = vector.load %arg9[%c0_46, %c0_47, %c0_48] : memref<4x1x8xf32, #tpu.memory_space<vmem>>, vector<4x1x8xf32>
    %64 = vector.broadcast %63 : vector<4x1x8xf32> to vector<4x8x8xf32>
    %65 = arith.addf %62, %64 : vector<4x8x8xf32>
    %66 = arith.truncf %65 : vector<4x8x8xf32> to vector<4x8x8xbf16>
    %c0_49 = arith.constant 0 : index
    %c0_50 = arith.constant 0 : index
    %c0_51 = arith.constant 0 : index
    %67 = vector.load %arg10[%c0_49, %c0_50, %c0_51] : memref<4x32x8xbf16, #tpu.memory_space<vmem>>, vector<1x32x8xbf16>
    %68 = vector.shape_cast %67 : vector<1x32x8xbf16> to vector<32x8xbf16>
    %cst_52 = arith.constant dense<0.000000e+00> : vector<8x8xf32>
    %69 = tpu.matmul %30, %68, %cst_52 {dimension_numbers = #tpu.dot_dimension_numbers<[1], [0], [0], [1], [0, 0, 1, 1], [], []>} : vector<8x32xbf16>, vector<32x8xbf16>, vector<8x8xf32> -> vector<8x8xf32>
    %c1_53 = arith.constant 1 : index
    %c0_54 = arith.constant 0 : index
    %c0_55 = arith.constant 0 : index
    %70 = vector.load %arg10[%c1_53, %c0_54, %c0_55] : memref<4x32x8xbf16, #tpu.memory_space<vmem>>, vector<1x32x8xbf16>
    %71 = vector.shape_cast %70 : vector<1x32x8xbf16> to vector<32x8xbf16>
    %cst_56 = arith.constant dense<0.000000e+00> : vector<8x8xf32>
    %72 = tpu.matmul %30, %71, %cst_56 {dimension_numbers = #tpu.dot_dimension_numbers<[1], [0], [0], [1], [0, 0, 1, 1], [], []>} : vector<8x32xbf16>, vector<32x8xbf16>, vector<8x8xf32> -> vector<8x8xf32>
    %c2_57 = arith.constant 2 : index
    %c0_58 = arith.constant 0 : index
    %c0_59 = arith.constant 0 : index
    %73 = vector.load %arg10[%c2_57, %c0_58, %c0_59] : memref<4x32x8xbf16, #tpu.memory_space<vmem>>, vector<1x32x8xbf16>
    %74 = vector.shape_cast %73 : vector<1x32x8xbf16> to vector<32x8xbf16>
    %cst_60 = arith.constant dense<0.000000e+00> : vector<8x8xf32>
    %75 = tpu.matmul %30, %74, %cst_60 {dimension_numbers = #tpu.dot_dimension_numbers<[1], [0], [0], [1], [0, 0, 1, 1], [], []>} : vector<8x32xbf16>, vector<32x8xbf16>, vector<8x8xf32> -> vector<8x8xf32>
    %c3_61 = arith.constant 3 : index
    %c0_62 = arith.constant 0 : index
    %c0_63 = arith.constant 0 : index
    %76 = vector.load %arg10[%c3_61, %c0_62, %c0_63] : memref<4x32x8xbf16, #tpu.memory_space<vmem>>, vector<1x32x8xbf16>
    %77 = vector.shape_cast %76 : vector<1x32x8xbf16> to vector<32x8xbf16>
    %cst_64 = arith.constant dense<0.000000e+00> : vector<8x8xf32>
    %78 = tpu.matmul %30, %77, %cst_64 {dimension_numbers = #tpu.dot_dimension_numbers<[1], [0], [0], [1], [0, 0, 1, 1], [], []>} : vector<8x32xbf16>, vector<32x8xbf16>, vector<8x8xf32> -> vector<8x8xf32>
    %79 = tpu.concatenate %69, %72, %75, %78 in 0 : vector<8x8xf32>, vector<8x8xf32>, vector<8x8xf32>, vector<8x8xf32> -> vector<32x8xf32>
    %80 = vector.shape_cast %79 : vector<32x8xf32> to vector<4x8x8xf32>
    %c0_65 = arith.constant 0 : index
    %c0_66 = arith.constant 0 : index
    %c0_67 = arith.constant 0 : index
    %81 = vector.load %arg11[%c0_65, %c0_66, %c0_67] : memref<4x1x8xf32, #tpu.memory_space<vmem>>, vector<4x1x8xf32>
    %82 = vector.broadcast %81 : vector<4x1x8xf32> to vector<4x8x8xf32>
    %83 = arith.addf %80, %82 : vector<4x8x8xf32>
    %84 = arith.truncf %83 : vector<4x8x8xf32> to vector<4x8x8xbf16>
    "tpu.trace_start"() <{level = 10 : i32, message = "gqd,gkd->gqk"}> : () -> ()
    %cst_68 = arith.constant dense<0.000000e+00> : vector<4x8x8xf32>
    %85 = tpu.matmul %48, %66, %cst_68 {dimension_numbers = #tpu.dot_dimension_numbers<[2], [2], [1], [1], [0, 0, 0, 1, 1, 1], [0], [0]>} : vector<4x8x8xbf16>, vector<4x8x8xbf16>, vector<4x8x8xf32> -> vector<4x8x8xf32>
    "tpu.trace_stop"() : () -> ()
    %cst_69 = arith.constant dense<0xFF800000> : vector<4x8xf32>
    %86 = vector.multi_reduction <maximumf>, %85, %cst_69 [2] : vector<4x8x8xf32> to vector<4x8xf32>
    %87 = vector.shape_cast %86 : vector<4x8xf32> to vector<4x8x1xf32>
    %88 = vector.broadcast %87 : vector<4x8x1xf32> to vector<4x8x8xf32>
    %89 = arith.subf %85, %88 : vector<4x8x8xf32>
    %90 = math.exp %89 : vector<4x8x8xf32>
    %cst_70 = arith.constant dense<0.000000e+00> : vector<4x8xf32>
    %91 = vector.multi_reduction <add>, %90, %cst_70 [2] : vector<4x8x8xf32> to vector<4x8xf32>
    %92 = vector.shape_cast %91 : vector<4x8xf32> to vector<4x8x1xf32>
    %93 = arith.truncf %90 : vector<4x8x8xf32> to vector<4x8x8xbf16>
    "tpu.trace_start"() <{level = 10 : i32, message = "gqk,gkd->gqd"}> : () -> ()
    %cst_71 = arith.constant dense<0.000000e+00> : vector<4x8x8xf32>
    %94 = tpu.matmul %93, %84, %cst_71 {dimension_numbers = #tpu.dot_dimension_numbers<[2], [1], [1], [2], [0, 0, 0, 1, 1, 2], [0], [0]>} : vector<4x8x8xbf16>, vector<4x8x8xbf16>, vector<4x8x8xf32> -> vector<4x8x8xf32>
    "tpu.trace_stop"() : () -> ()
    %95 = tpu.reciprocal %92 {approx = true} : vector<4x8x1xf32> -> vector<4x8x1xf32>
    %96 = vector.broadcast %95 : vector<4x8x1xf32> to vector<4x8x8xf32>
    %97 = arith.mulf %94, %96 : vector<4x8x8xf32>
    %98 = arith.truncf %97 : vector<4x8x8xf32> to vector<4x8x8xbf16>
    %c0_72 = arith.constant 0 : index
    %c0_73 = arith.constant 0 : index
    %c0_74 = arith.constant 0 : index
    %99 = vector.load %arg12[%c0_72, %c0_73, %c0_74] : memref<4x8x32xbf16, #tpu.memory_space<vmem>>, vector<4x8x32xbf16>
    "tpu.trace_start"() <{level = 10 : i32, message = "hnd,hde->hne"}> : () -> ()
    %cst_75 = arith.constant dense<0.000000e+00> : vector<4x8x32xf32>
    %100 = tpu.matmul %98, %99, %cst_75 {dimension_numbers = #tpu.dot_dimension_numbers<[2], [1], [1], [2], [0, 0, 0, 1, 1, 2], [0], [0]>} : vector<4x8x8xbf16>, vector<4x8x32xbf16>, vector<4x8x32xf32> -> vector<4x8x32xf32>
    "tpu.trace_stop"() : () -> ()
    %cst_76 = arith.constant dense<0.000000e+00> : vector<8x32xf32>
    %101 = vector.multi_reduction <add>, %100, %cst_76 [0] : vector<4x8x32xf32> to vector<8x32xf32>
    %c0_77 = arith.constant 0 : index
    %c0_78 = arith.constant 0 : index
    %102 = vector.load %arg13[%c0_77, %c0_78] : memref<1x32xf32, #tpu.memory_space<vmem>>, vector<1x32xf32>
    %103 = vector.broadcast %102 : vector<1x32xf32> to vector<8x32xf32>
    %104 = arith.addf %101, %103 : vector<8x32xf32>
    %105 = arith.addf %104, %5 : vector<8x32xf32>
    %c0_79 = arith.constant 0 : index
    %c0_80 = arith.constant 0 : index
    %106 = vector.load %arg14[%c0_79, %c0_80] : memref<1x32xf32, #tpu.memory_space<vmem>>, vector<1x32xf32>
    %c0_81 = arith.constant 0 : index
    %c0_82 = arith.constant 0 : index
    %107 = vector.load %arg15[%c0_81, %c0_82] : memref<1x32xf32, #tpu.memory_space<vmem>>, vector<1x32xf32>
    %cst_83 = arith.constant dense<0.000000e+00> : vector<8xf32>
    %108 = vector.multi_reduction <add>, %105, %cst_83 [1] : vector<8x32xf32> to vector<8xf32>
    %109 = vector.shape_cast %108 : vector<8xf32> to vector<8x1xf32>
    %cst_84 = arith.constant 3.200000e+01 : f32
    %110 = vector.broadcast %cst_84 : f32 to vector<8x1xf32>
    %111 = arith.divf %109, %110 : vector<8x1xf32>
    %112 = vector.broadcast %111 : vector<8x1xf32> to vector<8x32xf32>
    %113 = arith.subf %105, %112 : vector<8x32xf32>
    %114 = arith.mulf %113, %113 : vector<8x32xf32>
    %cst_85 = arith.constant dense<0.000000e+00> : vector<8xf32>
    %115 = vector.multi_reduction <add>, %114, %cst_85 [1] : vector<8x32xf32> to vector<8xf32>
    %116 = vector.shape_cast %115 : vector<8xf32> to vector<8x1xf32>
    %cst_86 = arith.constant 3.200000e+01 : f32
    %117 = vector.broadcast %cst_86 : f32 to vector<8x1xf32>
    %118 = arith.divf %116, %117 : vector<8x1xf32>
    %119 = vector.broadcast %111 : vector<8x1xf32> to vector<8x32xf32>
    %120 = arith.subf %105, %119 : vector<8x32xf32>
    %cst_87 = arith.constant 9.99999974E-6 : f32
    %121 = vector.broadcast %cst_87 : f32 to vector<8x1xf32>
    %122 = arith.addf %118, %121 : vector<8x1xf32>
    %123 = math.rsqrt %122 : vector<8x1xf32>
    %124 = vector.broadcast %123 : vector<8x1xf32> to vector<8x32xf32>
    %125 = arith.mulf %120, %124 : vector<8x32xf32>
    %126 = vector.broadcast %106 : vector<1x32xf32> to vector<8x32xf32>
    %127 = arith.mulf %125, %126 : vector<8x32xf32>
    %128 = vector.broadcast %107 : vector<1x32xf32> to vector<8x32xf32>
    %129 = arith.addf %127, %128 : vector<8x32xf32>
    %130 = arith.truncf %129 : vector<8x32xf32> to vector<8x32xbf16>
    %c0_88 = arith.constant 0 : index
    %c0_89 = arith.constant 0 : index
    %131 = vector.load %arg16[%c0_88, %c0_89] : memref<32x64xbf16, #tpu.memory_space<vmem>>, vector<32x64xbf16>
    %cst_90 = arith.constant dense<0.000000e+00> : vector<8x64xf32>
    %132 = tpu.matmul %130, %131, %cst_90 {dimension_numbers = #tpu.dot_dimension_numbers<[1], [0], [0], [1], [0, 0, 1, 1], [], []>} : vector<8x32xbf16>, vector<32x64xbf16>, vector<8x64xf32> -> vector<8x64xf32>
    %c0_91 = arith.constant 0 : index
    %c0_92 = arith.constant 0 : index
    %133 = vector.load %arg17[%c0_91, %c0_92] : memref<1x64xf32, #tpu.memory_space<vmem>>, vector<1x64xf32>
    %134 = vector.broadcast %133 : vector<1x64xf32> to vector<8x64xf32>
    %135 = arith.addf %132, %134 : vector<8x64xf32>
    %cst_93 = arith.constant 0.000000e+00 : f32
    %136 = vector.broadcast %cst_93 : f32 to vector<8x64xf32>
    %137 = arith.maximumf %135, %136 : vector<8x64xf32>
    %138 = arith.truncf %137 : vector<8x64xf32> to vector<8x64xbf16>
    %c0_94 = arith.constant 0 : index
    %c0_95 = arith.constant 0 : index
    %139 = vector.load %arg18[%c0_94, %c0_95] : memref<64x32xbf16, #tpu.memory_space<vmem>>, vector<64x32xbf16>
    %cst_96 = arith.constant dense<0.000000e+00> : vector<8x32xf32>
    %140 = tpu.matmul %138, %139, %cst_96 {dimension_numbers = #tpu.dot_dimension_numbers<[1], [0], [0], [1], [0, 0, 1, 1], [], []>} : vector<8x64xbf16>, vector<64x32xbf16>, vector<8x32xf32> -> vector<8x32xf32>
    %c0_97 = arith.constant 0 : index
    %c0_98 = arith.constant 0 : index
    %141 = vector.load %arg19[%c0_97, %c0_98] : memref<1x32xf32, #tpu.memory_space<vmem>>, vector<1x32xf32>
    %142 = vector.broadcast %141 : vector<1x32xf32> to vector<8x32xf32>
    %143 = arith.addf %140, %142 : vector<8x32xf32>
    %144 = arith.addf %143, %105 : vector<8x32xf32>
    %c0_99 = arith.constant 0 : index
    %c0_100 = arith.constant 0 : index
    %145 = vector.load %arg20[%c0_99, %c0_100] : memref<8x32xf32, #tpu.memory_space<vmem>>, vector<8x32xf32>
    tpu.vector_store %arg20[%c0_99, %c0_100], %144 {strides = array<i32>} : memref<8x32xf32, #tpu.memory_space<vmem>>, vector<8x32xf32>,
    return
  }
  func.func @transform_0(%arg0: i32) -> (i32, i32) {
    %c0_i32 = arith.constant 0 : i32
    %c0_i32_0 = arith.constant 0 : i32
    return %arg0, %c0_i32 : i32, i32
  }
  func.func @transform_1(%arg0: i32) -> (i32, i32) {
    %c0_i32 = arith.constant 0 : i32
    %c0_i32_0 = arith.constant 0 : i32
    %c0_i32_1 = arith.constant 0 : i32
    return %c0_i32, %c0_i32_0 : i32, i32
  }
  func.func @transform_2(%arg0: i32) -> (i32, i32) {
    %c0_i32 = arith.constant 0 : i32
    %c0_i32_0 = arith.constant 0 : i32
    %c0_i32_1 = arith.constant 0 : i32
    return %c0_i32, %c0_i32_0 : i32, i32
  }
  func.func @transform_3(%arg0: i32) -> (i32, i32) {
    %c0_i32 = arith.constant 0 : i32
    %c0_i32_0 = arith.constant 0 : i32
    %c0_i32_1 = arith.constant 0 : i32
    return %c0_i32, %c0_i32_0 : i32, i32
  }
  func.func @transform_4(%arg0: i32) -> (i32, i32) {
    %c0_i32 = arith.constant 0 : i32
    %c0_i32_0 = arith.constant 0 : i32
    %c0_i32_1 = arith.constant 0 : i32
    return %c0_i32, %c0_i32_0 : i32, i32
  }
  func.func @transform_5(%arg0: i32) -> (i32, i32, i32) {
    %c0_i32 = arith.constant 0 : i32
    %c0_i32_0 = arith.constant 0 : i32
    %c0_i32_1 = arith.constant 0 : i32
    %c0_i32_2 = arith.constant 0 : i32
    return %c0_i32, %c0_i32_0, %c0_i32_1 : i32, i32, i32
  }
  func.func @transform_6(%arg0: i32) -> (i32, i32, i32) {
    %c0_i32 = arith.constant 0 : i32
    %c0_i32_0 = arith.constant 0 : i32
    %c0_i32_1 = arith.constant 0 : i32
    %c0_i32_2 = arith.constant 0 : i32
    return %c0_i32, %c0_i32_0, %c0_i32_1 : i32, i32, i32
  }
  func.func @transform_7(%arg0: i32) -> (i32, i32, i32) {
    %c0_i32 = arith.constant 0 : i32
    %c0_i32_0 = arith.constant 0 : i32
    %c0_i32_1 = arith.constant 0 : i32
    %c0_i32_2 = arith.constant 0 : i32
    return %c0_i32, %c0_i32_0, %c0_i32_1 : i32, i32, i32
  }
  func.func @transform_8(%arg0: i32) -> (i32, i32, i32) {
    %c0_i32 = arith.constant 0 : i32
    %c0_i32_0 = arith.constant 0 : i32
    %c0_i32_1 = arith.constant 0 : i32
    %c0_i32_2 = arith.constant 0 : i32
    return %c0_i32, %c0_i32_0, %c0_i32_1 : i32, i32, i32
  }
  func.func @transform_9(%arg0: i32) -> (i32, i32, i32) {
    %c0_i32 = arith.constant 0 : i32
    %c0_i32_0 = arith.constant 0 : i32
    %c0_i32_1 = arith.constant 0 : i32
    %c0_i32_2 = arith.constant 0 : i32
    return %c0_i32, %c0_i32_0, %c0_i32_1 : i32, i32, i32
  }
  func.func @transform_10(%arg0: i32) -> (i32, i32, i32) {
    %c0_i32 = arith.constant 0 : i32
    %c0_i32_0 = arith.constant 0 : i32
    %c0_i32_1 = arith.constant 0 : i32
    %c0_i32_2 = arith.constant 0 : i32
    return %c0_i32, %c0_i32_0, %c0_i32_1 : i32, i32, i32
  }
  func.func @transform_11(%arg0: i32) -> (i32, i32, i32) {
    %c0_i32 = arith.constant 0 : i32
    %c0_i32_0 = arith.constant 0 : i32
    %c0_i32_1 = arith.constant 0 : i32
    %c0_i32_2 = arith.constant 0 : i32
    return %c0_i32, %c0_i32_0, %c0_i32_1 : i32, i32, i32
  }
  func.func @transform_12(%arg0: i32) -> (i32, i32) {
    %c0_i32 = arith.constant 0 : i32
    %c0_i32_0 = arith.constant 0 : i32
    %c0_i32_1 = arith.constant 0 : i32
    return %c0_i32, %c0_i32_0 : i32, i32
  }
  func.func @transform_13(%arg0: i32) -> (i32, i32) {
    %c0_i32 = arith.constant 0 : i32
    %c0_i32_0 = arith.constant 0 : i32
    %c0_i32_1 = arith.constant 0 : i32
    return %c0_i32, %c0_i32_0 : i32, i32
  }
  func.func @transform_14(%arg0: i32) -> (i32, i32) {
    %c0_i32 = arith.constant 0 : i32
    %c0_i32_0 = arith.constant 0 : i32
    %c0_i32_1 = arith.constant 0 : i32
    return %c0_i32, %c0_i32_0 : i32, i32
  }
  func.func @transform_15(%arg0: i32) -> (i32, i32) {
    %c0_i32 = arith.constant 0 : i32
    %c0_i32_0 = arith.constant 0 : i32
    %c0_i32_1 = arith.constant 0 : i32
    return %c0_i32, %c0_i32_0 : i32, i32
  }
  func.func @transform_16(%arg0: i32) -> (i32, i32) {
    %c0_i32 = arith.constant 0 : i32
    %c0_i32_0 = arith.constant 0 : i32
    %c0_i32_1 = arith.constant 0 : i32
    return %c0_i32, %c0_i32_0 : i32, i32
  }
  func.func @transform_17(%arg0: i32) -> (i32, i32) {
    %c0_i32 = arith.constant 0 : i32
    %c0_i32_0 = arith.constant 0 : i32
    %c0_i32_1 = arith.constant 0 : i32
    return %c0_i32, %c0_i32_0 : i32, i32
  }
  func.func @transform_18(%arg0: i32) -> (i32, i32) {
    %c0_i32 = arith.constant 0 : i32
    %c0_i32_0 = arith.constant 0 : i32
    %c0_i32_1 = arith.constant 0 : i32
    return %c0_i32, %c0_i32_0 : i32, i32
  }
  func.func @transform_19(%arg0: i32) -> (i32, i32) {
    %c0_i32 = arith.constant 0 : i32
    %c0_i32_0 = arith.constant 0 : i32
    return %arg0, %c0_i32 : i32, i32
  }
}

</mosaic_0001>

<llo_original>
// kernel: tpu_custom_call.1
$region0: #{tpu_custom_call.1}
  #allocation0 [shape = 'u32[]', space=smem, size = 0x4, offset = 0x4, fixed_abs, tag = 'smem constant byte address 0x4 - core index']
  #allocation1 [shape = 'u32[144,128]{1,0:T(1,128)}', space=vmem, size = 0x12000, scoped, tag = 'internal scratch']
  %s0 = inlined_call_operand.vmem [shape: bf16[16,16], index: 0, kind: input, shape index: {}]
  %s1 = inlined_call_operand.vmem [shape: bf16[16,32], index: 1, kind: input, shape index: {}]
  %s2 = inlined_call_operand.vmem [shape: f32[1,32], index: 2, kind: input, shape index: {}]
  %s3 = inlined_call_operand.vmem [shape: f32[1,32], index: 3, kind: input, shape index: {}]
  %s4 = inlined_call_operand.vmem [shape: f32[1,32], index: 4, kind: input, shape index: {}]
  %s5 = inlined_call_operand.vmem [shape: bf16[4,32,8], index: 5, kind: input, shape index: {}]
  %s6 = inlined_call_operand.vmem [shape: f32[4,1,8], index: 6, kind: input, shape index: {}]
  %s7 = inlined_call_operand.vmem [shape: bf16[4,32,8], index: 7, kind: input, shape index: {}]
  %s8 = inlined_call_operand.vmem [shape: f32[4,1,8], index: 8, kind: input, shape index: {}]
  %s9 = inlined_call_operand.vmem [shape: bf16[4,32,8], index: 9, kind: input, shape index: {}]
  %s10 = inlined_call_operand.vmem [shape: f32[4,1,8], index: 10, kind: input, shape index: {}]
  %s11 = inlined_call_operand.vmem [shape: bf16[4,8,32], index: 11, kind: input, shape index: {}]
  %s12 = inlined_call_operand.vmem [shape: f32[1,32], index: 12, kind: input, shape index: {}]
  %s13 = inlined_call_operand.vmem [shape: f32[1,32], index: 13, kind: input, shape index: {}]
  %s14 = inlined_call_operand.vmem [shape: f32[1,32], index: 14, kind: input, shape index: {}]
  %s15 = inlined_call_operand.vmem [shape: bf16[32,64], index: 15, kind: input, shape index: {}]
  %s16 = inlined_call_operand.vmem [shape: f32[1,64], index: 16, kind: input, shape index: {}]
  %s17 = inlined_call_operand.vmem [shape: bf16[64,32], index: 17, kind: input, shape index: {}]
  %s18 = inlined_call_operand.vmem [shape: f32[1,32], index: 18, kind: input, shape index: {}]
  %s19 = inlined_call_operand.hbm [shape: f32[16,32], index: 19, kind: output, shape index: {}]
  %s20 = sld [smem:[#allocation0]]
  $region109: #{tpu_custom_call.1} parent=0
    _
  %s22 = ssub.s32 1, %s20
  %s23 = scalar_select 0, %s22, %s20
  $region1: #{tpu_custom_call.1} parent=0
    #allocation2 [shape = 'u8[8192]{0}', space=vmem, size = 0x2000, scoped, tag = 'output window, operand 0']
    #allocation3 [shape = 's32[2]{0}', space=sflag, size = 0x8, scoped, tag = 'scoped memory for tpu_custom_call.1']
    %24 = vsyncpa [#allocation3], 0
    %s25 = scalar_lea.sflag [#allocation3], 1
    %26 = vsyncpa %s25, 0
    loop: start=0, step=1, limit=4
    $region2: #{tpu_custom_call.1} parent=1 // loop_pre_header
      _
    $region3: #{tpu_custom_call.1} parent=1 // loop_header
      %s28 = sphi 0, %s32
      %p29 = scmp.ge.s32.totalorder %s28, 4
      %s38 = sphi 0, %s40
      %s41 = sphi 0, %s38
      %s42 = sphi 0, %s41
      %s58 = sphi 0, %s42
      %s62 = sphi 0, %s62
      %s64 = sphi 0, %s62
      %s65 = sphi 0, %s64
      %s79 = sphi 0, %s65
      %s83 = sphi 0, %s83
      %s85 = sphi 0, %s83
      %s86 = sphi 0, %s85
      %s100 = sphi 0, %s86
      %s104 = sphi 0, %s104
      %s106 = sphi 0, %s104
      %s107 = sphi 0, %s106
      %s121 = sphi 0, %s107
      %s125 = sphi 0, %s125
      %s127 = sphi 0, %s125
      %s128 = sphi 0, %s127
      %s142 = sphi 0, %s128
      %s146 = sphi 0, %s146
      %s148 = sphi 0, %s146
      %s149 = sphi 0, %s148
      %s163 = sphi 0, %s149
      %s167 = sphi 0, %s167
      %s169 = sphi 0, %s167
      %s170 = sphi 0, %s169
      %s184 = sphi 0, %s170
      %s188 = sphi 0, %s188
      %s190 = sphi 0, %s188
      %s191 = sphi 0, %s190
      %s205 = sphi 0, %s191
      %s209 = sphi 0, %s209
      %s211 = sphi 0, %s209
      %s212 = sphi 0, %s211
      %s226 = sphi 0, %s212
      %s230 = sphi 0, %s230
      %s232 = sphi 0, %s230
      %s233 = sphi 0, %s232
      %s247 = sphi 0, %s233
      %s251 = sphi 0, %s251
      %s253 = sphi 0, %s251
      %s254 = sphi 0, %s253
      %s268 = sphi 0, %s254
      %s272 = sphi 0, %s272
      %s274 = sphi 0, %s272
      %s275 = sphi 0, %s274
      %s289 = sphi 0, %s275
      %s293 = sphi 0, %s293
      %s295 = sphi 0, %s293
      %s296 = sphi 0, %s295
      %s310 = sphi 0, %s296
      %s314 = sphi 0, %s314
      %s316 = sphi 0, %s314
      %s317 = sphi 0, %s316
      %s331 = sphi 0, %s317
      %s335 = sphi 0, %s335
      %s337 = sphi 0, %s335
      %s338 = sphi 0, %s337
      %s352 = sphi 0, %s338
      %s356 = sphi 0, %s356
      %s358 = sphi 0, %s356
      %s359 = sphi 0, %s358
      %s373 = sphi 0, %s359
      %s377 = sphi 0, %s377
      %s379 = sphi 0, %s377
      %s380 = sphi 0, %s379
      %s394 = sphi 0, %s380
      %s398 = sphi 0, %s398
      %s400 = sphi 0, %s398
      %s401 = sphi 0, %s400
      %s415 = sphi 0, %s401
      %s419 = sphi 0, %s419
      %s421 = sphi 0, %s419
      %s422 = sphi 0, %s421
      %s436 = sphi 0, %s422
      %s442 = sphi 0, %s444
      %s445 = sphi 0, %s442
      %s446 = sphi 0, %s445
      %s462 = sphi 0, %s446
    $region4: #{tpu_custom_call.1} parent=1 // loop_header_branch
      %31 = sbr.rel (%p29) target = $region8
    $region5: #{tpu_custom_call.1} parent=1 // loop_body
      %s33 = ssub.s32 %s28, 1
      %s34 = ssub.s32 %s28, 2
      %s35 = sadd.s32 %s28, 1
      %s36 = ssub.s32 %s28, %s35
      %p37 = scmp.eq.s32.totalorder %s36, 0
      %s39 = sadd.s32 %s38, 1
      %s40 = scalar_select %p37, %s38, %s39
      %p43 = pneg %p37
      %p44 = scmp.eq.s32.totalorder %s28, 1
      %p45 = por %p43, %p44
      %p46 = scmp.ne.s32.totalorder %s38, %s41
      %p47 = scmp.eq.s32.totalorder %s28, 0
      %p48 = por %p46, %p47
      %p49 = scmp.ne.s32.totalorder %s38, %s41
      %p50 = scmp.eq.s32.totalorder %s33, 1
      %p51 = por %p49, %p50
      %p52 = scmp.ne.s32.totalorder %s41, %s42
      %p53 = scmp.eq.s32.totalorder %s33, 0
      %p54 = por %p52, %p53
      %p55 = scmp.ne.s32.totalorder %s41, %s42
      %p56 = scmp.eq.s32.totalorder %s34, 1
      %p57 = por %p55, %p56
      %p59 = scmp.ne.s32.totalorder %s42, %s58
      %p60 = scmp.eq.s32.totalorder %s34, 0
      %p61 = por %p59, %p60
      %s63 = sadd.s32 %s62, 1
      %p66 = scmp.eq.s32.totalorder %s28, 1
      %p67 = scmp.ne.s32.totalorder %s62, %s64
      %p68 = scmp.eq.s32.totalorder %s28, 0
      %p69 = por %p67, %p68
      %p70 = scmp.ne.s32.totalorder %s62, %s64
      %p71 = scmp.eq.s32.totalorder %s33, 1
      %p72 = por %p70, %p71
      %p73 = scmp.ne.s32.totalorder %s64, %s65
      %p74 = scmp.eq.s32.totalorder %s33, 0
      %p75 = por %p73, %p74
      %p76 = scmp.ne.s32.totalorder %s64, %s65
      %p77 = scmp.eq.s32.totalorder %s34, 1
      %p78 = por %p76, %p77
      %p80 = scmp.ne.s32.totalorder %s65, %s79
      %p81 = scmp.eq.s32.totalorder %s34, 0
      %p82 = por %p80, %p81
      %s84 = sadd.s32 %s83, 1
      %p87 = scmp.eq.s32.totalorder %s28, 1
      %p88 = scmp.ne.s32.totalorder %s83, %s85
      %p89 = scmp.eq.s32.totalorder %s28, 0
      %p90 = por %p88, %p89
      %p91 = scmp.ne.s32.totalorder %s83, %s85
      %p92 = scmp.eq.s32.totalorder %s33, 1
      %p93 = por %p91, %p92
      %p94 = scmp.ne.s32.totalorder %s85, %s86
      %p95 = scmp.eq.s32.totalorder %s33, 0
      %p96 = por %p94, %p95
      %p97 = scmp.ne.s32.totalorder %s85, %s86
      %p98 = scmp.eq.s32.totalorder %s34, 1
      %p99 = por %p97, %p98
      %p101 = scmp.ne.s32.totalorder %s86, %s100
      %p102 = scmp.eq.s32.totalorder %s34, 0
      %p103 = por %p101, %p102
      %s105 = sadd.s32 %s104, 1
      %p108 = scmp.eq.s32.totalorder %s28, 1
      %p109 = scmp.ne.s32.totalorder %s104, %s106
      %p110 = scmp.eq.s32.totalorder %s28, 0
      %p111 = por %p109, %p110
      %p112 = scmp.ne.s32.totalorder %s104, %s106
      %p113 = scmp.eq.s32.totalorder %s33, 1
      %p114 = por %p112, %p113
      %p115 = scmp.ne.s32.totalorder %s106, %s107
      %p116 = scmp.eq.s32.totalorder %s33, 0
      %p117 = por %p115, %p116
      %p118 = scmp.ne.s32.totalorder %s106, %s107
      %p119 = scmp.eq.s32.totalorder %s34, 1
      %p120 = por %p118, %p119
      %p122 = scmp.ne.s32.totalorder %s107, %s121
      %p123 = scmp.eq.s32.totalorder %s34, 0
      %p124 = por %p122, %p123
      %s126 = sadd.s32 %s125, 1
      %p129 = scmp.eq.s32.totalorder %s28, 1
      %p130 = scmp.ne.s32.totalorder %s125, %s127
      %p131 = scmp.eq.s32.totalorder %s28, 0
      %p132 = por %p130, %p131
      %p133 = scmp.ne.s32.totalorder %s125, %s127
      %p134 = scmp.eq.s32.totalorder %s33, 1
      %p135 = por %p133, %p134
      %p136 = scmp.ne.s32.totalorder %s127, %s128
      %p137 = scmp.eq.s32.totalorder %s33, 0
      %p138 = por %p136, %p137
      %p139 = scmp.ne.s32.totalorder %s127, %s128
      %p140 = scmp.eq.s32.totalorder %s34, 1
      %p141 = por %p139, %p140
      %p143 = scmp.ne.s32.totalorder %s128, %s142
      %p144 = scmp.eq.s32.totalorder %s34, 0
      %p145 = por %p143, %p144
      %s147 = sadd.s32 %s146, 1
      %p150 = scmp.eq.s32.totalorder %s28, 1
      %p151 = scmp.ne.s32.totalorder %s146, %s148
      %p152 = scmp.eq.s32.totalorder %s28, 0
      %p153 = por %p151, %p152
      %p154 = scmp.ne.s32.totalorder %s146, %s148
      %p155 = scmp.eq.s32.totalorder %s33, 1
      %p156 = por %p154, %p155
      %p157 = scmp.ne.s32.totalorder %s148, %s149
      %p158 = scmp.eq.s32.totalorder %s33, 0
      %p159 = por %p157, %p158
      %p160 = scmp.ne.s32.totalorder %s148, %s149
      %p161 = scmp.eq.s32.totalorder %s34, 1
      %p162 = por %p160, %p161
      %p164 = scmp.ne.s32.totalorder %s149, %s163
      %p165 = scmp.eq.s32.totalorder %s34, 0
      %p166 = por %p164, %p165
      %s168 = sadd.s32 %s167, 1
      %p171 = scmp.eq.s32.totalorder %s28, 1
      %p172 = scmp.ne.s32.totalorder %s167, %s169
      %p173 = scmp.eq.s32.totalorder %s28, 0
      %p174 = por %p172, %p173
      %p175 = scmp.ne.s32.totalorder %s167, %s169
      %p176 = scmp.eq.s32.totalorder %s33, 1
      %p177 = por %p175, %p176
      %p178 = scmp.ne.s32.totalorder %s169, %s170
      %p179 = scmp.eq.s32.totalorder %s33, 0
      %p180 = por %p178, %p179
      %p181 = scmp.ne.s32.totalorder %s169, %s170
      %p182 = scmp.eq.s32.totalorder %s34, 1
      %p183 = por %p181, %p182
      %p185 = scmp.ne.s32.totalorder %s170, %s184
      %p186 = scmp.eq.s32.totalorder %s34, 0
      %p187 = por %p185, %p186
      %s189 = sadd.s32 %s188, 1
      %p192 = scmp.eq.s32.totalorder %s28, 1
      %p193 = scmp.ne.s32.totalorder %s188, %s190
      %p194 = scmp.eq.s32.totalorder %s28, 0
      %p195 = por %p193, %p194
      %p196 = scmp.ne.s32.totalorder %s188, %s190
      %p197 = scmp.eq.s32.totalorder %s33, 1
      %p198 = por %p196, %p197
      %p199 = scmp.ne.s32.totalorder %s190, %s191
      %p200 = scmp.eq.s32.totalorder %s33, 0
      %p201 = por %p199, %p200
      %p202 = scmp.ne.s32.totalorder %s190, %s191
      %p203 = scmp.eq.s32.totalorder %s34, 1
      %p204 = por %p202, %p203
      %p206 = scmp.ne.s32.totalorder %s191, %s205
      %p207 = scmp.eq.s32.totalorder %s34, 0
      %p208 = por %p206, %p207
      %s210 = sadd.s32 %s209, 1
      %p213 = scmp.eq.s32.totalorder %s28, 1
      %p214 = scmp.ne.s32.totalorder %s209, %s211
      %p215 = scmp.eq.s32.totalorder %s28, 0
      %p216 = por %p214, %p215
      %p217 = scmp.ne.s32.totalorder %s209, %s211
      %p218 = scmp.eq.s32.totalorder %s33, 1
      %p219 = por %p217, %p218
      %p220 = scmp.ne.s32.totalorder %s211, %s212
      %p221 = scmp.eq.s32.totalorder %s33, 0
      %p222 = por %p220, %p221
      %p223 = scmp.ne.s32.totalorder %s211, %s212
      %p224 = scmp.eq.s32.totalorder %s34, 1
      %p225 = por %p223, %p224
      %p227 = scmp.ne.s32.totalorder %s212, %s226
      %p228 = scmp.eq.s32.totalorder %s34, 0
      %p229 = por %p227, %p228
      %s231 = sadd.s32 %s230, 1
      %p234 = scmp.eq.s32.totalorder %s28, 1
      %p235 = scmp.ne.s32.totalorder %s230, %s232
      %p236 = scmp.eq.s32.totalorder %s28, 0
      %p237 = por %p235, %p236
      %p238 = scmp.ne.s32.totalorder %s230, %s232
      %p239 = scmp.eq.s32.totalorder %s33, 1
      %p240 = por %p238, %p239
      %p241 = scmp.ne.s32.totalorder %s232, %s233
      %p242 = scmp.eq.s32.totalorder %s33, 0
      %p243 = por %p241, %p242
      %p244 = scmp.ne.s32.totalorder %s232, %s233
      %p245 = scmp.eq.s32.totalorder %s34, 1
      %p246 = por %p244, %p245
      %p248 = scmp.ne.s32.totalorder %s233, %s247
      %p249 = scmp.eq.s32.totalorder %s34, 0
      %p250 = por %p248, %p249
      %s252 = sadd.s32 %s251, 1
      %p255 = scmp.eq.s32.totalorder %s28, 1
      %p256 = scmp.ne.s32.totalorder %s251, %s253
      %p257 = scmp.eq.s32.totalorder %s28, 0
      %p258 = por %p256, %p257
      %p259 = scmp.ne.s32.totalorder %s251, %s253
      %p260 = scmp.eq.s32.totalorder %s33, 1
      %p261 = por %p259, %p260
      %p262 = scmp.ne.s32.totalorder %s253, %s254
      %p263 = scmp.eq.s32.totalorder %s33, 0
      %p264 = por %p262, %p263
      %p265 = scmp.ne.s32.totalorder %s253, %s254
      %p266 = scmp.eq.s32.totalorder %s34, 1
      %p267 = por %p265, %p266
      %p269 = scmp.ne.s32.totalorder %s254, %s268
      %p270 = scmp.eq.s32.totalorder %s34, 0
      %p271 = por %p269, %p270
      %s273 = sadd.s32 %s272, 1
      %p276 = scmp.eq.s32.totalorder %s28, 1
      %p277 = scmp.ne.s32.totalorder %s272, %s274
      %p278 = scmp.eq.s32.totalorder %s28, 0
      %p279 = por %p277, %p278
      %p280 = scmp.ne.s32.totalorder %s272, %s274
      %p281 = scmp.eq.s32.totalorder %s33, 1
      %p282 = por %p280, %p281
      %p283 = scmp.ne.s32.totalorder %s274, %s275
      %p284 = scmp.eq.s32.totalorder %s33, 0
      %p285 = por %p283, %p284
      %p286 = scmp.ne.s32.totalorder %s274, %s275
      %p287 = scmp.eq.s32.totalorder %s34, 1
      %p288 = por %p286, %p287
      %p290 = scmp.ne.s32.totalorder %s275, %s289
      %p291 = scmp.eq.s32.totalorder %s34, 0
      %p292 = por %p290, %p291
      %s294 = sadd.s32 %s293, 1
      %p297 = scmp.eq.s32.totalorder %s28, 1
      %p298 = scmp.ne.s32.totalorder %s293, %s295
      %p299 = scmp.eq.s32.totalorder %s28, 0
      %p300 = por %p298, %p299
      %p301 = scmp.ne.s32.totalorder %s293, %s295
      %p302 = scmp.eq.s32.totalorder %s33, 1
      %p303 = por %p301, %p302
      %p304 = scmp.ne.s32.totalorder %s295, %s296
      %p305 = scmp.eq.s32.totalorder %s33, 0
      %p306 = por %p304, %p305
      %p307 = scmp.ne.s32.totalorder %s295, %s296
      %p308 = scmp.eq.s32.totalorder %s34, 1
      %p309 = por %p307, %p308
      %p311 = scmp.ne.s32.totalorder %s296, %s310
      %p312 = scmp.eq.s32.totalorder %s34, 0
      %p313 = por %p311, %p312
      %s315 = sadd.s32 %s314, 1
      %p318 = scmp.eq.s32.totalorder %s28, 1
      %p319 = scmp.ne.s32.totalorder %s314, %s316
      %p320 = scmp.eq.s32.totalorder %s28, 0
      %p321 = por %p319, %p320
      %p322 = scmp.ne.s32.totalorder %s314, %s316
      %p323 = scmp.eq.s32.totalorder %s33, 1
      %p324 = por %p322, %p323
      %p325 = scmp.ne.s32.totalorder %s316, %s317
      %p326 = scmp.eq.s32.totalorder %s33, 0
      %p327 = por %p325, %p326
      %p328 = scmp.ne.s32.totalorder %s316, %s317
      %p329 = scmp.eq.s32.totalorder %s34, 1
      %p330 = por %p328, %p329
      %p332 = scmp.ne.s32.totalorder %s317, %s331
      %p333 = scmp.eq.s32.totalorder %s34, 0
      %p334 = por %p332, %p333
      %s336 = sadd.s32 %s335, 1
      %p339 = scmp.eq.s32.totalorder %s28, 1
      %p340 = scmp.ne.s32.totalorder %s335, %s337
      %p341 = scmp.eq.s32.totalorder %s28, 0
      %p342 = por %p340, %p341
      %p343 = scmp.ne.s32.totalorder %s335, %s337
      %p344 = scmp.eq.s32.totalorder %s33, 1
      %p345 = por %p343, %p344
      %p346 = scmp.ne.s32.totalorder %s337, %s338
      %p347 = scmp.eq.s32.totalorder %s33, 0
      %p348 = por %p346, %p347
      %p349 = scmp.ne.s32.totalorder %s337, %s338
      %p350 = scmp.eq.s32.totalorder %s34, 1
      %p351 = por %p349, %p350
      %p353 = scmp.ne.s32.totalorder %s338, %s352
      %p354 = scmp.eq.s32.totalorder %s34, 0
      %p355 = por %p353, %p354
      %s357 = sadd.s32 %s356, 1
      %p360 = scmp.eq.s32.totalorder %s28, 1
      %p361 = scmp.ne.s32.totalorder %s356, %s358
      %p362 = scmp.eq.s32.totalorder %s28, 0
      %p363 = por %p361, %p362
      %p364 = scmp.ne.s32.totalorder %s356, %s358
      %p365 = scmp.eq.s32.totalorder %s33, 1
      %p366 = por %p364, %p365
      %p367 = scmp.ne.s32.totalorder %s358, %s359
      %p368 = scmp.eq.s32.totalorder %s33, 0
      %p369 = por %p367, %p368
      %p370 = scmp.ne.s32.totalorder %s358, %s359
      %p371 = scmp.eq.s32.totalorder %s34, 1
      %p372 = por %p370, %p371
      %p374 = scmp.ne.s32.totalorder %s359, %s373
      %p375 = scmp.eq.s32.totalorder %s34, 0
      %p376 = por %p374, %p375
      %s378 = sadd.s32 %s377, 1
      %p381 = scmp.eq.s32.totalorder %s28, 1
      %p382 = scmp.ne.s32.totalorder %s377, %s379
      %p383 = scmp.eq.s32.totalorder %s28, 0
      %p384 = por %p382, %p383
      %p385 = scmp.ne.s32.totalorder %s377, %s379
      %p386 = scmp.eq.s32.totalorder %s33, 1
      %p387 = por %p385, %p386
      %p388 = scmp.ne.s32.totalorder %s379, %s380
      %p389 = scmp.eq.s32.totalorder %s33, 0
      %p390 = por %p388, %p389
      %p391 = scmp.ne.s32.totalorder %s379, %s380
      %p392 = scmp.eq.s32.totalorder %s34, 1
      %p393 = por %p391, %p392
      %p395 = scmp.ne.s32.totalorder %s380, %s394
      %p396 = scmp.eq.s32.totalorder %s34, 0
      %p397 = por %p395, %p396
      %s399 = sadd.s32 %s398, 1
      %p402 = scmp.eq.s32.totalorder %s28, 1
      %p403 = scmp.ne.s32.totalorder %s398, %s400
      %p404 = scmp.eq.s32.totalorder %s28, 0
      %p405 = por %p403, %p404
      %p406 = scmp.ne.s32.totalorder %s398, %s400
      %p407 = scmp.eq.s32.totalorder %s33, 1
      %p408 = por %p406, %p407
      %p409 = scmp.ne.s32.totalorder %s400, %s401
      %p410 = scmp.eq.s32.totalorder %s33, 0
      %p411 = por %p409, %p410
      %p412 = scmp.ne.s32.totalorder %s400, %s401
      %p413 = scmp.eq.s32.totalorder %s34, 1
      %p414 = por %p412, %p413
      %p416 = scmp.ne.s32.totalorder %s401, %s415
      %p417 = scmp.eq.s32.totalorder %s34, 0
      %p418 = por %p416, %p417
      %s420 = sadd.s32 %s419, 1
      %p423 = scmp.eq.s32.totalorder %s28, 1
      %p424 = scmp.ne.s32.totalorder %s419, %s421
      %p425 = scmp.eq.s32.totalorder %s28, 0
      %p426 = por %p424, %p425
      %p427 = scmp.ne.s32.totalorder %s419, %s421
      %p428 = scmp.eq.s32.totalorder %s33, 1
      %p429 = por %p427, %p428
      %p430 = scmp.ne.s32.totalorder %s421, %s422
      %p431 = scmp.eq.s32.totalorder %s33, 0
      %p432 = por %p430, %p431
      %p433 = scmp.ne.s32.totalorder %s421, %s422
      %p434 = scmp.eq.s32.totalorder %s34, 1
      %p435 = por %p433, %p434
      %p437 = scmp.ne.s32.totalorder %s422, %s436
      %p438 = scmp.eq.s32.totalorder %s34, 0
      %p439 = por %p437, %p438
      %s440 = ssub.s32 %s28, %s35
      %p441 = scmp.eq.s32.totalorder %s440, 0
      %s443 = sadd.s32 %s442, 1
      %s444 = scalar_select %p441, %s442, %s443
      %p447 = pneg %p441
      %p448 = scmp.eq.s32.totalorder %s28, 1
      %p449 = por %p447, %p448
      %p450 = scmp.ne.s32.totalorder %s442, %s445
      %p451 = scmp.eq.s32.totalorder %s28, 0
      %p452 = por %p450, %p451
      %p453 = scmp.ne.s32.totalorder %s442, %s445
      %p454 = scmp.eq.s32.totalorder %s33, 1
      %p455 = por %p453, %p454
      %p456 = scmp.ne.s32.totalorder %s445, %s446
      %p457 = scmp.eq.s32.totalorder %s33, 0
      %p458 = por %p456, %p457
      %p459 = scmp.ne.s32.totalorder %s445, %s446
      %p460 = scmp.eq.s32.totalorder %s34, 1
      %p461 = por %p459, %p460
      %p463 = scmp.ne.s32.totalorder %s446, %s462
      %p464 = scmp.eq.s32.totalorder %s34, 0
      %p465 = por %p463, %p464
      %p466 = scmp.le.s32.totalorder 1, %s28
      %p467 = scmp.lt.s32.totalorder %s28, 3
      %p468 = pnand %p466, %p467
      %p469 = pneg %p468
      // Predicated region
      $region9: #{tpu_custom_call.1} parent=5 // pred_check
        _
      $region10: #{tpu_custom_call.1} parent=5 // pred_check_branch
        %471 = sbr.rel (%p468) target = $region12
      $region11: #{tpu_custom_call.1} parent=5 // pred_region
        %s472 = ssub.s32 %s28, 1
        // Predicated region
        $region13: #{tpu_custom_call.1} parent=11 // pred_check
          %p473 = pneg %p75
        $region14: #{tpu_custom_call.1} parent=11 // pred_check_branch
          %475 = sbr.rel (%p473) target = $region16
        $region15: #{tpu_custom_call.1} parent=11 // pred_region
          _
        $region16: #{tpu_custom_call.1} parent=11 // pred_fallthru
          _
        // Predicated region
        $region17: #{tpu_custom_call.1} parent=11 // pred_check
          %p476 = pneg %p96
        $region18: #{tpu_custom_call.1} parent=11 // pred_check_branch
          %478 = sbr.rel (%p476) target = $region20
        $region19: #{tpu_custom_call.1} parent=11 // pred_region
          _
        $region20: #{tpu_custom_call.1} parent=11 // pred_fallthru
          _
        // Predicated region
        $region21: #{tpu_custom_call.1} parent=11 // pred_check
          %p479 = pneg %p117
        $region22: #{tpu_custom_call.1} parent=11 // pred_check_branch
          %481 = sbr.rel (%p479) target = $region24
        $region23: #{tpu_custom_call.1} parent=11 // pred_region
          _
        $region24: #{tpu_custom_call.1} parent=11 // pred_fallthru
          _
        // Predicated region
        $region25: #{tpu_custom_call.1} parent=11 // pred_check
          %p482 = pneg %p138
        $region26: #{tpu_custom_call.1} parent=11 // pred_check_branch
          %484 = sbr.rel (%p482) target = $region28
        $region27: #{tpu_custom_call.1} parent=11 // pred_region
          _
        $region28: #{tpu_custom_call.1} parent=11 // pred_fallthru
          _
        // Predicated region
        $region29: #{tpu_custom_call.1} parent=11 // pred_check
          %p485 = pneg %p159
        $region30: #{tpu_custom_call.1} parent=11 // pred_check_branch
          %487 = sbr.rel (%p485) target = $region32
        $region31: #{tpu_custom_call.1} parent=11 // pred_region
          _
        $region32: #{tpu_custom_call.1} parent=11 // pred_fallthru
          _
        // Predicated region
        $region33: #{tpu_custom_call.1} parent=11 // pred_check
          %p488 = pneg %p180
        $region34: #{tpu_custom_call.1} parent=11 // pred_check_branch
          %490 = sbr.rel (%p488) target = $region36
        $region35: #{tpu_custom_call.1} parent=11 // pred_region
          _
        $region36: #{tpu_custom_call.1} parent=11 // pred_fallthru
          _
        // Predicated region
        $region37: #{tpu_custom_call.1} parent=11 // pred_check
          %p491 = pneg %p201
        $region38: #{tpu_custom_call.1} parent=11 // pred_check_branch
          %493 = sbr.rel (%p491) target = $region40
        $region39: #{tpu_custom_call.1} parent=11 // pred_region
          _
        $region40: #{tpu_custom_call.1} parent=11 // pred_fallthru
          _
        // Predicated region
        $region41: #{tpu_custom_call.1} parent=11 // pred_check
          %p494 = pneg %p222
        $region42: #{tpu_custom_call.1} parent=11 // pred_check_branch
          %496 = sbr.rel (%p494) target = $region44
        $region43: #{tpu_custom_call.1} parent=11 // pred_region
          _
        $region44: #{tpu_custom_call.1} parent=11 // pred_fallthru
          _
        // Predicated region
        $region45: #{tpu_custom_call.1} parent=11 // pred_check
          %p497 = pneg %p243
        $region46: #{tpu_custom_call.1} parent=11 // pred_check_branch
          %499 = sbr.rel (%p497) target = $region48
        $region47: #{tpu_custom_call.1} parent=11 // pred_region
          _
        $region48: #{tpu_custom_call.1} parent=11 // pred_fallthru
          _
        // Predicated region
        $region49: #{tpu_custom_call.1} parent=11 // pred_check
          %p500 = pneg %p264
        $region50: #{tpu_custom_call.1} parent=11 // pred_check_branch
          %502 = sbr.rel (%p500) target = $region52
        $region51: #{tpu_custom_call.1} parent=11 // pred_region
          _
        $region52: #{tpu_custom_call.1} parent=11 // pred_fallthru
          _
        // Predicated region
        $region53: #{tpu_custom_call.1} parent=11 // pred_check
          %p503 = pneg %p285
        $region54: #{tpu_custom_call.1} parent=11 // pred_check_branch
          %505 = sbr.rel (%p503) target = $region56
        $region55: #{tpu_custom_call.1} parent=11 // pred_region
          _
        $region56: #{tpu_custom_call.1} parent=11 // pred_fallthru
          _
        // Predicated region
        $region57: #{tpu_custom_call.1} parent=11 // pred_check
          %p506 = pneg %p306
        $region58: #{tpu_custom_call.1} parent=11 // pred_check_branch
          %508 = sbr.rel (%p506) target = $region60
        $region59: #{tpu_custom_call.1} parent=11 // pred_region
          _
        $region60: #{tpu_custom_call.1} parent=11 // pred_fallthru
          _
        // Predicated region
        $region61: #{tpu_custom_call.1} parent=11 // pred_check
          %p509 = pneg %p327
        $region62: #{tpu_custom_call.1} parent=11 // pred_check_branch
          %511 = sbr.rel (%p509) target = $region64
        $region63: #{tpu_custom_call.1} parent=11 // pred_region
          _
        $region64: #{tpu_custom_call.1} parent=11 // pred_fallthru
          _
        // Predicated region
        $region65: #{tpu_custom_call.1} parent=11 // pred_check
          %p512 = pneg %p348
        $region66: #{tpu_custom_call.1} parent=11 // pred_check_branch
          %514 = sbr.rel (%p512) target = $region68
        $region67: #{tpu_custom_call.1} parent=11 // pred_region
          _
        $region68: #{tpu_custom_call.1} parent=11 // pred_fallthru
          _
        // Predicated region
        $region69: #{tpu_custom_call.1} parent=11 // pred_check
          %p515 = pneg %p369
        $region70: #{tpu_custom_call.1} parent=11 // pred_check_branch
          %517 = sbr.rel (%p515) target = $region72
        $region71: #{tpu_custom_call.1} parent=11 // pred_region
          _
        $region72: #{tpu_custom_call.1} parent=11 // pred_fallthru
          _
        // Predicated region
        $region73: #{tpu_custom_call.1} parent=11 // pred_check
          %p518 = pneg %p390
        $region74: #{tpu_custom_call.1} parent=11 // pred_check_branch
          %520 = sbr.rel (%p518) target = $region76
        $region75: #{tpu_custom_call.1} parent=11 // pred_region
          _
        $region76: #{tpu_custom_call.1} parent=11 // pred_fallthru
          _
        // Predicated region
        $region77: #{tpu_custom_call.1} parent=11 // pred_check
          %p521 = pneg %p411
        $region78: #{tpu_custom_call.1} parent=11 // pred_check_branch
          %523 = sbr.rel (%p521) target = $region80
        $region79: #{tpu_custom_call.1} parent=11 // pred_region
          _
        $region80: #{tpu_custom_call.1} parent=11 // pred_fallthru
          _
        // Predicated region
        $region81: #{tpu_custom_call.1} parent=11 // pred_check
          %p524 = pneg %p432
        $region82: #{tpu_custom_call.1} parent=11 // pred_check_branch
          %526 = sbr.rel (%p524) target = $region84
        $region83: #{tpu_custom_call.1} parent=11 // pred_region
          _
        $region84: #{tpu_custom_call.1} parent=11 // pred_fallthru
          _
      $region12: #{tpu_custom_call.1} parent=5 // pred_fallthru
        _
      %p527 = scmp.lt.s32.totalorder %s28, 2
      // Predicated region
      $region85: #{tpu_custom_call.1} parent=5 // pred_check
        %p528 = pneg %p527
      $region86: #{tpu_custom_call.1} parent=5 // pred_check_branch
        %530 = sbr.rel (%p528) target = $region88
      $region87: #{tpu_custom_call.1} parent=5 // pred_region
        // Predicated region
        $region89: #{tpu_custom_call.1} parent=87 // pred_check
          %p531 = pneg %p48
        $region90: #{tpu_custom_call.1} parent=87 // pred_check_branch
          %533 = sbr.rel (%p531) target = $region92
        $region91: #{tpu_custom_call.1} parent=87 // pred_region
          %p534 = scmp.lt.s32.totalorder %s28, 1
          %s535 = scalar_select %p534, %s28, 1
          %s536 = smul.addr %s535, 4
          %s537 = scalar_lea.vmem %s0, %s536
        $region92: #{tpu_custom_call.1} parent=87 // pred_fallthru
          _
      $region88: #{tpu_custom_call.1} parent=5 // pred_fallthru
        _
      %p538 = scmp.le.s32.totalorder 1, %s28
      %p539 = scmp.lt.s32.totalorder %s28, 3
      %p540 = pnand %p538, %p539
      %p541 = pneg %p540
      // Predicated region
      $region93: #{tpu_custom_call.1} parent=5 // pred_check
        _
      $region94: #{tpu_custom_call.1} parent=5 // pred_check_branch
        %543 = sbr.rel (%p540) target = $region96
      $region95: #{tpu_custom_call.1} parent=5 // pred_region
        %s544 = ssub.s32 %s28, 1
        %p545 = scmp.lt.s32.totalorder %s33, 1
        %s546 = scalar_select %p545, %s33, 1
        %s547 = smul.addr %s546, 4
        %s548 = scalar_lea.vmem %s0, %s547
        %p549 = pneg %p54
        %p550 = pneg %p51
        %p551 = pneg %p75
        %p552 = pneg %p72
        %p553 = pneg %p96
        %p554 = pneg %p93
        %p555 = pneg %p117
        %p556 = pneg %p114
        %p557 = pneg %p138
        %p558 = pneg %p135
        %p559 = pneg %p159
        %p560 = pneg %p156
        %p561 = pneg %p180
        %p562 = pneg %p177
        %p563 = pneg %p201
        %p564 = pneg %p198
        %p565 = pneg %p222
        %p566 = pneg %p219
        %p567 = pneg %p243
        %p568 = pneg %p240
        %p569 = pneg %p264
        %p570 = pneg %p261
        %p571 = pneg %p285
        %p572 = pneg %p282
        %p573 = pneg %p306
        %p574 = pneg %p303
        %p575 = pneg %p327
        %p576 = pneg %p324
        %p577 = pneg %p348
        %p578 = pneg %p345
        %p579 = pneg %p369
        %p580 = pneg %p366
        %p581 = pneg %p390
        %p582 = pneg %p387
        %p583 = pneg %p411
        %p584 = pneg %p408
        %p585 = pneg %p432
        %p586 = pneg %p429
        %p587 = pneg %p458
        %p588 = pneg %p455
        %s589 = sand.u32 %s445, 1
        %s590 = scalar_lea.sflag [#allocation3], %s589
        %s591 = sand.u32 %s445, 1
        %s592 = smul.addr %s591, 8
        %s593 = scalar_lea.vmem [#allocation2], %s592
        %p594 = scmp.lt.s32.totalorder %s33, 1
        %s595 = scalar_select %p594, %s33, 1
        %s596 = smul.addr %s595, 4
        %s597 = scalar_lea.vmem %s0, %s596
        %v599 = vld [vmem:[%s597] sm:$0xf]
        %v600 = vld [vmem:[%s1] sm:$0xf]
        %v601 = vld [vmem:[%s1 + $0x4] sm:$0xf]
        %v602 = vld [vmem:[%s2] sm:$0x1]
        %v604 = vlaneseq
        %v605 = vshrl.u32 %v604, 7
        %v606 = vsub.s32 0, %v605
        %v607 = vrot.slane %v602, %v606
        %v611 = vunpack.c.l.b16 %v600
        %v612 = vunpack.c.l.b16 %v601
        %v613 = vpack.c.b16 %v612, %v611
        %vm615 = vcmask 130048
        %v617 = vsel %vm615, %v599, 0
        %619 = vmatprep.subr.bf16.mxu0 0
        %620 = vmatpush1.bf16.msra.mxu0 %v613
        %621 = vmatprep.subr.bf16.mxu0 0
        %622 = vmatpush1.bf16.msra.mxu0 0
        %623 = vmatprep.subr.bf16.mxu0 0
        %624 = vmatpush1.bf16.msra.mxu0 0
        %625 = vmatprep.subr.bf16.mxu0 0
        %626 = vmatpush1.bf16.msra.mxu0 0
        %627 = vmatprep.subr.bf16.mxu0 0
        %628 = vmatpush1.bf16.msra.mxu0 0
        %629 = vmatprep.subr.bf16.mxu0 0
        %630 = vmatpush1.bf16.msra.mxu0 0
        %631 = vmatprep.subr.bf16.mxu0 0
        %632 = vmatpush1.bf16.msra.mxu0 0
        %633 = vmatprep.subr.bf16.mxu0 0
        %634 = vmatpush1.bf16.msra.mxu0 0
        %635 = vmatprep.subr.bf16.mxu0 0
        %636 = vmatpush1.bf16.msra.mxu0 0
        %637 = vmatprep.subr.bf16.mxu0 0
        %638 = vmatpush1.bf16.msra.mxu0 0
        %639 = vmatprep.subr.bf16.mxu0 0
        %640 = vmatpush1.bf16.msra.mxu0 0
        %641 = vmatprep.subr.bf16.mxu0 0
        %642 = vmatpush1.bf16.msra.mxu0 0
        %643 = vmatprep.subr.bf16.mxu0 0
        %644 = vmatpush1.bf16.msra.mxu0 0
        %645 = vmatprep.subr.bf16.mxu0 0
        %646 = vmatpush1.bf16.msra.mxu0 0
        %647 = vmatprep.subr.bf16.mxu0 0
        %648 = vmatpush1.bf16.msra.mxu0 0
        %649 = vmatprep.subr.bf16.mxu0 0
        %650 = vmatpush1.bf16.msra.mxu0 0
        %651 = vmatprep.mubr.bf16.mxu0 0
        %652 = vmatmul.mubr.bf16.gmra.mrb[0].mxu0 %v617
        %v653 = vpop.f32.mrb[0].mxu0
        %v654 = vadd.f32 %v607, %v653
        %v655 = vpop.f32.mrb[0].mxu0
        %v656 = vpop.f32.mrb[0].mxu0
        %v657 = vpop.f32.mrb[0].mxu0
        %658 = vdwg.mxu0
        %v659 = vld [vmem:[%s3] sm:$0x1]
        %v660 = vld [vmem:[%s4] sm:$0x1]
        %vm661 = vcmask 261120
        %v662 = vsel %vm661, %v654, 0.0
        %663 = vadd.xlane.f32.xlu0 %v662
        %v664 = vpop.xlane.xlu0 %663
        %v665 = vrcp.pop 32.0
        %v666 = vmul.f32 %v664, %v665
        %v667 = vsub.f32 %v654, %v666
        %v668 = vmul.f32 %v667, %v667
        %v669 = vsel %vm661, %v668, 0.0
        %670 = vadd.xlane.f32.xlu0 %v669
        %v671 = vpop.xlane.xlu0 %670
        %v672 = vmul.f32 %v671, %v665
        %v673 = vadd.f32 %v672, 1e-05
        %v674 = vrsqrt.pop %v673
        %v675 = vmul.f32 %v667, %v674
        %v677 = vlaneseq
        %v678 = vshrl.u32 %v677, 7
        %v679 = vsub.s32 0, %v678
        %v680 = vrot.slane %v659, %v679
        %v682 = vmul.f32 %v675, %v680
        %v684 = vlaneseq
        %v685 = vshrl.u32 %v684, 7
        %v686 = vsub.s32 0, %v685
        %v687 = vrot.slane %v660, %v686
        %v689 = vadd.f32 %v682, %v687
        %v690 = vpack.c.bf16 %v689, %v689
        %v691 = vld [vmem:[%s5] sm:$0xf]
        %v692 = vld [vmem:[%s5 + $0x4] sm:$0xf]
        %v693 = vld [vmem:[%s5 + $0x8] sm:$0xf]
        %v694 = vld [vmem:[%s5 + $0xc] sm:$0xf]
        %v699 = vunpack.c.l.b16 %v691
        %v700 = vunpack.c.l.b16 %v692
        %v701 = vunpack.c.l.b16 %v693
        %v702 = vunpack.c.l.b16 %v694
        %v703 = vpack.c.b16 %v700, %v699
        %v704 = vpack.c.b16 %v702, %v701
        %v708 = vsel %vm661, %v690, 0
        %710 = vmatprep.subr.bf16.mxu0 0
        %711 = vmatpush1.bf16.msra.mxu0 %v703
        %712 = vmatprep.subr.bf16.mxu0 0
        %713 = vmatpush1.bf16.msra.mxu0 %v704
        %714 = vmatprep.subr.bf16.mxu0 0
        %715 = vmatpush1.bf16.msra.mxu0 0
        %716 = vmatprep.subr.bf16.mxu0 0
        %717 = vmatpush1.bf16.msra.mxu0 0
        %718 = vmatprep.subr.bf16.mxu0 0
        %719 = vmatpush1.bf16.msra.mxu0 0
        %720 = vmatprep.subr.bf16.mxu0 0
        %721 = vmatpush1.bf16.msra.mxu0 0
        %722 = vmatprep.subr.bf16.mxu0 0
        %723 = vmatpush1.bf16.msra.mxu0 0
        %724 = vmatprep.subr.bf16.mxu0 0
        %725 = vmatpush1.bf16.msra.mxu0 0
        %726 = vmatprep.subr.bf16.mxu0 0
        %727 = vmatpush1.bf16.msra.mxu0 0
        %728 = vmatprep.subr.bf16.mxu0 0
        %729 = vmatpush1.bf16.msra.mxu0 0
        %730 = vmatprep.subr.bf16.mxu0 0
        %731 = vmatpush1.bf16.msra.mxu0 0
        %732 = vmatprep.subr.bf16.mxu0 0
        %733 = vmatpush1.bf16.msra.mxu0 0
        %734 = vmatprep.subr.bf16.mxu0 0
        %735 = vmatpush1.bf16.msra.mxu0 0
        %736 = vmatprep.subr.bf16.mxu0 0
        %737 = vmatpush1.bf16.msra.mxu0 0
        %738 = vmatprep.subr.bf16.mxu0 0
        %739 = vmatpush1.bf16.msra.mxu0 0
        %740 = vmatprep.subr.bf16.mxu0 0
        %741 = vmatpush1.bf16.msra.mxu0 0
        %742 = vmatprep.mubr.bf16.mxu0 0
        %743 = vmatmul.mubr.bf16.gmra.mrb[0].mxu0 %v708
        %v744 = vpop.f32.mrb[0].mxu0
        %v745 = vadd.f32 0.0, %v744
        %v746 = vpop.f32.mrb[0].mxu0
        %v747 = vpop.f32.mrb[0].mxu0
        %v748 = vpop.f32.mrb[0].mxu0
        %749 = vdwg.mxu0
        %s750 = scalar_lea.vmem %s5, 16
        %v751 = vld [vmem:[%s750] sm:$0xf]
        %v752 = vld [vmem:[%s750 + $0x4] sm:$0xf]
        %v753 = vld [vmem:[%s750 + $0x8] sm:$0xf]
        %v754 = vld [vmem:[%s750 + $0xc] sm:$0xf]
        %v759 = vunpack.c.l.b16 %v751
        %v760 = vunpack.c.l.b16 %v752
        %v761 = vunpack.c.l.b16 %v753
        %v762 = vunpack.c.l.b16 %v754
        %v763 = vpack.c.b16 %v760, %v759
        %v764 = vpack.c.b16 %v762, %v761
        %767 = vmatprep.subr.bf16.mxu0 0
        %768 = vmatpush1.bf16.msra.mxu0 %v763
        %769 = vmatprep.subr.bf16.mxu0 0
        %770 = vmatpush1.bf16.msra.mxu0 %v764
        %771 = vmatprep.subr.bf16.mxu0 0
        %772 = vmatpush1.bf16.msra.mxu0 0
        %773 = vmatprep.subr.bf16.mxu0 0
        %774 = vmatpush1.bf16.msra.mxu0 0
        %775 = vmatprep.subr.bf16.mxu0 0
        %776 = vmatpush1.bf16.msra.mxu0 0
        %777 = vmatprep.subr.bf16.mxu0 0
        %778 = vmatpush1.bf16.msra.mxu0 0
        %779 = vmatprep.subr.bf16.mxu0 0
        %780 = vmatpush1.bf16.msra.mxu0 0
        %781 = vmatprep.subr.bf16.mxu0 0
        %782 = vmatpush1.bf16.msra.mxu0 0
        %783 = vmatprep.subr.bf16.mxu0 0
        %784 = vmatpush1.bf16.msra.mxu0 0
        %785 = vmatprep.subr.bf16.mxu0 0
        %786 = vmatpush1.bf16.msra.mxu0 0
        %787 = vmatprep.subr.bf16.mxu0 0
        %788 = vmatpush1.bf16.msra.mxu0 0
        %789 = vmatprep.subr.bf16.mxu0 0
        %790 = vmatpush1.bf16.msra.mxu0 0
        %791 = vmatprep.subr.bf16.mxu0 0
        %792 = vmatpush1.bf16.msra.mxu0 0
        %793 = vmatprep.subr.bf16.mxu0 0
        %794 = vmatpush1.bf16.msra.mxu0 0
        %795 = vmatprep.subr.bf16.mxu0 0
        %796 = vmatpush1.bf16.msra.mxu0 0
        %797 = vmatprep.subr.bf16.mxu0 0
        %798 = vmatpush1.bf16.msra.mxu0 0
        %799 = vmatprep.mubr.bf16.mxu0 0
        %800 = vmatmul.mubr.bf16.gmra.mrb[0].mxu0 %v708
        %v801 = vpop.f32.mrb[0].mxu0
        %v802 = vadd.f32 0.0, %v801
        %v803 = vpop.f32.mrb[0].mxu0
        %v804 = vpop.f32.mrb[0].mxu0
        %v805 = vpop.f32.mrb[0].mxu0
        %806 = vdwg.mxu0
        %s807 = scalar_lea.vmem %s5, 32
        %v808 = vld [vmem:[%s807] sm:$0xf]
        %v809 = vld [vmem:[%s807 + $0x4] sm:$0xf]
        %v810 = vld [vmem:[%s807 + $0x8] sm:$0xf]
        %v811 = vld [vmem:[%s807 + $0xc] sm:$0xf]
        %v816 = vunpack.c.l.b16 %v808
        %v817 = vunpack.c.l.b16 %v809
        %v818 = vunpack.c.l.b16 %v810
        %v819 = vunpack.c.l.b16 %v811
        %v820 = vpack.c.b16 %v817, %v816
        %v821 = vpack.c.b16 %v819, %v818
        %824 = vmatprep.subr.bf16.mxu0 0
        %825 = vmatpush1.bf16.msra.mxu0 %v820
        %826 = vmatprep.subr.bf16.mxu0 0
        %827 = vmatpush1.bf16.msra.mxu0 %v821
        %828 = vmatprep.subr.bf16.mxu0 0
        %829 = vmatpush1.bf16.msra.mxu0 0
        %830 = vmatprep.subr.bf16.mxu0 0
        %831 = vmatpush1.bf16.msra.mxu0 0
        %832 = vmatprep.subr.bf16.mxu0 0
        %833 = vmatpush1.bf16.msra.mxu0 0
        %834 = vmatprep.subr.bf16.mxu0 0
        %835 = vmatpush1.bf16.msra.mxu0 0
        %836 = vmatprep.subr.bf16.mxu0 0
        %837 = vmatpush1.bf16.msra.mxu0 0
        %838 = vmatprep.subr.bf16.mxu0 0
        %839 = vmatpush1.bf16.msra.mxu0 0
        %840 = vmatprep.subr.bf16.mxu0 0
        %841 = vmatpush1.bf16.msra.mxu0 0
        %842 = vmatprep.subr.bf16.mxu0 0
        %843 = vmatpush1.bf16.msra.mxu0 0
        %844 = vmatprep.subr.bf16.mxu0 0
        %845 = vmatpush1.bf16.msra.mxu0 0
        %846 = vmatprep.subr.bf16.mxu0 0
        %847 = vmatpush1.bf16.msra.mxu0 0
        %848 = vmatprep.subr.bf16.mxu0 0
        %849 = vmatpush1.bf16.msra.mxu0 0
        %850 = vmatprep.subr.bf16.mxu0 0
        %851 = vmatpush1.bf16.msra.mxu0 0
        %852 = vmatprep.subr.bf16.mxu0 0
        %853 = vmatpush1.bf16.msra.mxu0 0
        %854 = vmatprep.subr.bf16.mxu0 0
        %855 = vmatpush1.bf16.msra.mxu0 0
        %856 = vmatprep.mubr.bf16.mxu0 0
        %857 = vmatmul.mubr.bf16.gmra.mrb[0].mxu0 %v708
        %v858 = vpop.f32.mrb[0].mxu0
        %v859 = vadd.f32 0.0, %v858
        %v860 = vpop.f32.mrb[0].mxu0
        %v861 = vpop.f32.mrb[0].mxu0
        %v862 = vpop.f32.mrb[0].mxu0
        %863 = vdwg.mxu0
        %s864 = scalar_lea.vmem %s5, 48
        %v865 = vld [vmem:[%s864] sm:$0xf]
        %v866 = vld [vmem:[%s864 + $0x4] sm:$0xf]
        %v867 = vld [vmem:[%s864 + $0x8] sm:$0xf]
        %v868 = vld [vmem:[%s864 + $0xc] sm:$0xf]
        %v873 = vunpack.c.l.b16 %v865
        %v874 = vunpack.c.l.b16 %v866
        %v875 = vunpack.c.l.b16 %v867
        %v876 = vunpack.c.l.b16 %v868
        %v877 = vpack.c.b16 %v874, %v873
        %v878 = vpack.c.b16 %v876, %v875
        %881 = vmatprep.subr.bf16.mxu0 0
        %882 = vmatpush1.bf16.msra.mxu0 %v877
        %883 = vmatprep.subr.bf16.mxu0 0
        %884 = vmatpush1.bf16.msra.mxu0 %v878
        %885 = vmatprep.subr.bf16.mxu0 0
        %886 = vmatpush1.bf16.msra.mxu0 0
        %887 = vmatprep.subr.bf16.mxu0 0
        %888 = vmatpush1.bf16.msra.mxu0 0
        %889 = vmatprep.subr.bf16.mxu0 0
        %890 = vmatpush1.bf16.msra.mxu0 0
        %891 = vmatprep.subr.bf16.mxu0 0
        %892 = vmatpush1.bf16.msra.mxu0 0
        %893 = vmatprep.subr.bf16.mxu0 0
        %894 = vmatpush1.bf16.msra.mxu0 0
        %895 = vmatprep.subr.bf16.mxu0 0
        %896 = vmatpush1.bf16.msra.mxu0 0
        %897 = vmatprep.subr.bf16.mxu0 0
        %898 = vmatpush1.bf16.msra.mxu0 0
        %899 = vmatprep.subr.bf16.mxu0 0
        %900 = vmatpush1.bf16.msra.mxu0 0
        %901 = vmatprep.subr.bf16.mxu0 0
        %902 = vmatpush1.bf16.msra.mxu0 0
        %903 = vmatprep.subr.bf16.mxu0 0
        %904 = vmatpush1.bf16.msra.mxu0 0
        %905 = vmatprep.subr.bf16.mxu0 0
        %906 = vmatpush1.bf16.msra.mxu0 0
        %907 = vmatprep.subr.bf16.mxu0 0
        %908 = vmatpush1.bf16.msra.mxu0 0
        %909 = vmatprep.subr.bf16.mxu0 0
        %910 = vmatpush1.bf16.msra.mxu0 0
        %911 = vmatprep.subr.bf16.mxu0 0
        %912 = vmatpush1.bf16.msra.mxu0 0
        %913 = vmatprep.mubr.bf16.mxu0 0
        %914 = vmatmul.mubr.bf16.gmra.mrb[0].mxu0 %v708
        %v915 = vpop.f32.mrb[0].mxu0
        %v916 = vadd.f32 0.0, %v915
        %v917 = vpop.f32.mrb[0].mxu0
        %v918 = vpop.f32.mrb[0].mxu0
        %v919 = vpop.f32.mrb[0].mxu0
        %920 = vdwg.mxu0
        %v921 = vld [vmem:[%s6] sm:$0x1]
        %v922 = vld [vmem:[%s6 + $0x1] sm:$0x1]
        %v923 = vld [vmem:[%s6 + $0x2] sm:$0x1]
        %v924 = vld [vmem:[%s6 + $0x3] sm:$0x1]
        %v929 = vlaneseq
        %v930 = vshrl.u32 %v929, 7
        %v931 = vsub.s32 0, %v930
        %v932 = vrot.slane %v921, %v931
        %v933 = vlaneseq
        %v934 = vshrl.u32 %v933, 7
        %v935 = vsub.s32 0, %v934
        %v936 = vrot.slane %v922, %v935
        %v937 = vlaneseq
        %v938 = vshrl.u32 %v937, 7
        %v939 = vsub.s32 0, %v938
        %v940 = vrot.slane %v923, %v939
        %v941 = vlaneseq
        %v942 = vshrl.u32 %v941, 7
        %v943 = vsub.s32 0, %v942
        %v944 = vrot.slane %v924, %v943
        %v949 = vadd.f32 %v745, %v932
        %v950 = vadd.f32 %v802, %v936
        %v951 = vadd.f32 %v859, %v940
        %v952 = vadd.f32 %v916, %v944
        %v953 = vpack.c.bf16 %v949, %v949
        %v954 = vpack.c.bf16 %v950, %v950
        %v955 = vpack.c.bf16 %v951, %v951
        %v956 = vpack.c.bf16 %v952, %v952
        %v957 = vld [vmem:[%s7] sm:$0xf]
        %v958 = vld [vmem:[%s7 + $0x4] sm:$0xf]
        %v959 = vld [vmem:[%s7 + $0x8] sm:$0xf]
        %v960 = vld [vmem:[%s7 + $0xc] sm:$0xf]
        %v965 = vunpack.c.l.b16 %v957
        %v966 = vunpack.c.l.b16 %v958
        %v967 = vunpack.c.l.b16 %v959
        %v968 = vunpack.c.l.b16 %v960
        %v969 = vpack.c.b16 %v966, %v965
        %v970 = vpack.c.b16 %v968, %v967
        %973 = vmatprep.subr.bf16.mxu0 0
        %974 = vmatpush1.bf16.msra.mxu0 %v969
        %975 = vmatprep.subr.bf16.mxu0 0
        %976 = vmatpush1.bf16.msra.mxu0 %v970
        %977 = vmatprep.subr.bf16.mxu0 0
        %978 = vmatpush1.bf16.msra.mxu0 0
        %979 = vmatprep.subr.bf16.mxu0 0
        %980 = vmatpush1.bf16.msra.mxu0 0
        %981 = vmatprep.subr.bf16.mxu0 0
        %982 = vmatpush1.bf16.msra.mxu0 0
        %983 = vmatprep.subr.bf16.mxu0 0
        %984 = vmatpush1.bf16.msra.mxu0 0
        %985 = vmatprep.subr.bf16.mxu0 0
        %986 = vmatpush1.bf16.msra.mxu0 0
        %987 = vmatprep.subr.bf16.mxu0 0
        %988 = vmatpush1.bf16.msra.mxu0 0
        %989 = vmatprep.subr.bf16.mxu0 0
        %990 = vmatpush1.bf16.msra.mxu0 0
        %991 = vmatprep.subr.bf16.mxu0 0
        %992 = vmatpush1.bf16.msra.mxu0 0
        %993 = vmatprep.subr.bf16.mxu0 0
        %994 = vmatpush1.bf16.msra.mxu0 0
        %995 = vmatprep.subr.bf16.mxu0 0
        %996 = vmatpush1.bf16.msra.mxu0 0
        %997 = vmatprep.subr.bf16.mxu0 0
        %998 = vmatpush1.bf16.msra.mxu0 0
        %999 = vmatprep.subr.bf16.mxu0 0
        %1000 = vmatpush1.bf16.msra.mxu0 0
        %1001 = vmatprep.subr.bf16.mxu0 0
        %1002 = vmatpush1.bf16.msra.mxu0 0
        %1003 = vmatprep.subr.bf16.mxu0 0
        %1004 = vmatpush1.bf16.msra.mxu0 0
        %1005 = vmatprep.mubr.bf16.mxu0 0
        %1006 = vmatmul.mubr.bf16.gmra.mrb[0].mxu0 %v708
        %v1007 = vpop.f32.mrb[0].mxu0
        %v1008 = vadd.f32 0.0, %v1007
        %v1009 = vpop.f32.mrb[0].mxu0
        %v1010 = vpop.f32.mrb[0].mxu0
        %v1011 = vpop.f32.mrb[0].mxu0
        %1012 = vdwg.mxu0
        %s1013 = scalar_lea.vmem %s7, 16
        %v1014 = vld [vmem:[%s1013] sm:$0xf]
        %v1015 = vld [vmem:[%s1013 + $0x4] sm:$0xf]
        %v1016 = vld [vmem:[%s1013 + $0x8] sm:$0xf]
        %v1017 = vld [vmem:[%s1013 + $0xc] sm:$0xf]
        %v1022 = vunpack.c.l.b16 %v1014
        %v1023 = vunpack.c.l.b16 %v1015
        %v1024 = vunpack.c.l.b16 %v1016
        %v1025 = vunpack.c.l.b16 %v1017
        %v1026 = vpack.c.b16 %v1023, %v1022
        %v1027 = vpack.c.b16 %v1025, %v1024
        %1030 = vmatprep.subr.bf16.mxu0 0
        %1031 = vmatpush1.bf16.msra.mxu0 %v1026
        %1032 = vmatprep.subr.bf16.mxu0 0
        %1033 = vmatpush1.bf16.msra.mxu0 %v1027
        %1034 = vmatprep.subr.bf16.mxu0 0
        %1035 = vmatpush1.bf16.msra.mxu0 0
        %1036 = vmatprep.subr.bf16.mxu0 0
        %1037 = vmatpush1.bf16.msra.mxu0 0
        %1038 = vmatprep.subr.bf16.mxu0 0
        %1039 = vmatpush1.bf16.msra.mxu0 0
        %1040 = vmatprep.subr.bf16.mxu0 0
        %1041 = vmatpush1.bf16.msra.mxu0 0
        %1042 = vmatprep.subr.bf16.mxu0 0
        %1043 = vmatpush1.bf16.msra.mxu0 0
        %1044 = vmatprep.subr.bf16.mxu0 0
        %1045 = vmatpush1.bf16.msra.mxu0 0
        %1046 = vmatprep.subr.bf16.mxu0 0
        %1047 = vmatpush1.bf16.msra.mxu0 0
        %1048 = vmatprep.subr.bf16.mxu0 0
        %1049 = vmatpush1.bf16.msra.mxu0 0
        %1050 = vmatprep.subr.bf16.mxu0 0
        %1051 = vmatpush1.bf16.msra.mxu0 0
        %1052 = vmatprep.subr.bf16.mxu0 0
        %1053 = vmatpush1.bf16.msra.mxu0 0
        %1054 = vmatprep.subr.bf16.mxu0 0
        %1055 = vmatpush1.bf16.msra.mxu0 0
        %1056 = vmatprep.subr.bf16.mxu0 0
        %1057 = vmatpush1.bf16.msra.mxu0 0
        %1058 = vmatprep.subr.bf16.mxu0 0
        %1059 = vmatpush1.bf16.msra.mxu0 0
        %1060 = vmatprep.subr.bf16.mxu0 0
        %1061 = vmatpush1.bf16.msra.mxu0 0
        %1062 = vmatprep.mubr.bf16.mxu0 0
        %1063 = vmatmul.mubr.bf16.gmra.mrb[0].mxu0 %v708
        %v1064 = vpop.f32.mrb[0].mxu0
        %v1065 = vadd.f32 0.0, %v1064
        %v1066 = vpop.f32.mrb[0].mxu0
        %v1067 = vpop.f32.mrb[0].mxu0
        %v1068 = vpop.f32.mrb[0].mxu0
        %1069 = vdwg.mxu0
        %s1070 = scalar_lea.vmem %s7, 32
        %v1071 = vld [vmem:[%s1070] sm:$0xf]
        %v1072 = vld [vmem:[%s1070 + $0x4] sm:$0xf]
        %v1073 = vld [vmem:[%s1070 + $0x8] sm:$0xf]
        %v1074 = vld [vmem:[%s1070 + $0xc] sm:$0xf]
        %v1079 = vunpack.c.l.b16 %v1071
        %v1080 = vunpack.c.l.b16 %v1072
        %v1081 = vunpack.c.l.b16 %v1073
        %v1082 = vunpack.c.l.b16 %v1074
        %v1083 = vpack.c.b16 %v1080, %v1079
        %v1084 = vpack.c.b16 %v1082, %v1081
        %1087 = vmatprep.subr.bf16.mxu0 0
        %1088 = vmatpush1.bf16.msra.mxu0 %v1083
        %1089 = vmatprep.subr.bf16.mxu0 0
        %1090 = vmatpush1.bf16.msra.mxu0 %v1084
        %1091 = vmatprep.subr.bf16.mxu0 0
        %1092 = vmatpush1.bf16.msra.mxu0 0
        %1093 = vmatprep.subr.bf16.mxu0 0
        %1094 = vmatpush1.bf16.msra.mxu0 0
        %1095 = vmatprep.subr.bf16.mxu0 0
        %1096 = vmatpush1.bf16.msra.mxu0 0
        %1097 = vmatprep.subr.bf16.mxu0 0
        %1098 = vmatpush1.bf16.msra.mxu0 0
        %1099 = vmatprep.subr.bf16.mxu0 0
        %1100 = vmatpush1.bf16.msra.mxu0 0
        %1101 = vmatprep.subr.bf16.mxu0 0
        %1102 = vmatpush1.bf16.msra.mxu0 0
        %1103 = vmatprep.subr.bf16.mxu0 0
        %1104 = vmatpush1.bf16.msra.mxu0 0
        %1105 = vmatprep.subr.bf16.mxu0 0
        %1106 = vmatpush1.bf16.msra.mxu0 0
        %1107 = vmatprep.subr.bf16.mxu0 0
        %1108 = vmatpush1.bf16.msra.mxu0 0
        %1109 = vmatprep.subr.bf16.mxu0 0
        %1110 = vmatpush1.bf16.msra.mxu0 0
        %1111 = vmatprep.subr.bf16.mxu0 0
        %1112 = vmatpush1.bf16.msra.mxu0 0
        %1113 = vmatprep.subr.bf16.mxu0 0
        %1114 = vmatpush1.bf16.msra.mxu0 0
        %1115 = vmatprep.subr.bf16.mxu0 0
        %1116 = vmatpush1.bf16.msra.mxu0 0
        %1117 = vmatprep.subr.bf16.mxu0 0
        %1118 = vmatpush1.bf16.msra.mxu0 0
        %1119 = vmatprep.mubr.bf16.mxu0 0
        %1120 = vmatmul.mubr.bf16.gmra.mrb[0].mxu0 %v708
        %v1121 = vpop.f32.mrb[0].mxu0
        %v1122 = vadd.f32 0.0, %v1121
        %v1123 = vpop.f32.mrb[0].mxu0
        %v1124 = vpop.f32.mrb[0].mxu0
        %v1125 = vpop.f32.mrb[0].mxu0
        %1126 = vdwg.mxu0
        %s1127 = scalar_lea.vmem %s7, 48
        %v1128 = vld [vmem:[%s1127] sm:$0xf]
        %v1129 = vld [vmem:[%s1127 + $0x4] sm:$0xf]
        %v1130 = vld [vmem:[%s1127 + $0x8] sm:$0xf]
        %v1131 = vld [vmem:[%s1127 + $0xc] sm:$0xf]
        %v1136 = vunpack.c.l.b16 %v1128
        %v1137 = vunpack.c.l.b16 %v1129
        %v1138 = vunpack.c.l.b16 %v1130
        %v1139 = vunpack.c.l.b16 %v1131
        %v1140 = vpack.c.b16 %v1137, %v1136
        %v1141 = vpack.c.b16 %v1139, %v1138
        %1144 = vmatprep.subr.bf16.mxu0 0
        %1145 = vmatpush1.bf16.msra.mxu0 %v1140
        %1146 = vmatprep.subr.bf16.mxu0 0
        %1147 = vmatpush1.bf16.msra.mxu0 %v1141
        %1148 = vmatprep.subr.bf16.mxu0 0
        %1149 = vmatpush1.bf16.msra.mxu0 0
        %1150 = vmatprep.subr.bf16.mxu0 0
        %1151 = vmatpush1.bf16.msra.mxu0 0
        %1152 = vmatprep.subr.bf16.mxu0 0
        %1153 = vmatpush1.bf16.msra.mxu0 0
        %1154 = vmatprep.subr.bf16.mxu0 0
        %1155 = vmatpush1.bf16.msra.mxu0 0
        %1156 = vmatprep.subr.bf16.mxu0 0
        %1157 = vmatpush1.bf16.msra.mxu0 0
        %1158 = vmatprep.subr.bf16.mxu0 0
        %1159 = vmatpush1.bf16.msra.mxu0 0
        %1160 = vmatprep.subr.bf16.mxu0 0
        %1161 = vmatpush1.bf16.msra.mxu0 0
        %1162 = vmatprep.subr.bf16.mxu0 0
        %1163 = vmatpush1.bf16.msra.mxu0 0
        %1164 = vmatprep.subr.bf16.mxu0 0
        %1165 = vmatpush1.bf16.msra.mxu0 0
        %1166 = vmatprep.subr.bf16.mxu0 0
        %1167 = vmatpush1.bf16.msra.mxu0 0
        %1168 = vmatprep.subr.bf16.mxu0 0
        %1169 = vmatpush1.bf16.msra.mxu0 0
        %1170 = vmatprep.subr.bf16.mxu0 0
        %1171 = vmatpush1.bf16.msra.mxu0 0
        %1172 = vmatprep.subr.bf16.mxu0 0
        %1173 = vmatpush1.bf16.msra.mxu0 0
        %1174 = vmatprep.subr.bf16.mxu0 0
        %1175 = vmatpush1.bf16.msra.mxu0 0
        %1176 = vmatprep.mubr.bf16.mxu0 0
        %1177 = vmatmul.mubr.bf16.gmra.mrb[0].mxu0 %v708
        %v1178 = vpop.f32.mrb[0].mxu0
        %v1179 = vadd.f32 0.0, %v1178
        %v1180 = vpop.f32.mrb[0].mxu0
        %v1181 = vpop.f32.mrb[0].mxu0
        %v1182 = vpop.f32.mrb[0].mxu0
        %1183 = vdwg.mxu0
        %v1184 = vld [vmem:[%s8] sm:$0x1]
        %v1185 = vld [vmem:[%s8 + $0x1] sm:$0x1]
        %v1186 = vld [vmem:[%s8 + $0x2] sm:$0x1]
        %v1187 = vld [vmem:[%s8 + $0x3] sm:$0x1]
        %v1192 = vlaneseq
        %v1193 = vshrl.u32 %v1192, 7
        %v1194 = vsub.s32 0, %v1193
        %v1195 = vrot.slane %v1184, %v1194
        %v1196 = vlaneseq
        %v1197 = vshrl.u32 %v1196, 7
        %v1198 = vsub.s32 0, %v1197
        %v1199 = vrot.slane %v1185, %v1198
        %v1200 = vlaneseq
        %v1201 = vshrl.u32 %v1200, 7
        %v1202 = vsub.s32 0, %v1201
        %v1203 = vrot.slane %v1186, %v1202
        %v1204 = vlaneseq
        %v1205 = vshrl.u32 %v1204, 7
        %v1206 = vsub.s32 0, %v1205
        %v1207 = vrot.slane %v1187, %v1206
        %v1212 = vadd.f32 %v1008, %v1195
        %v1213 = vadd.f32 %v1065, %v1199
        %v1214 = vadd.f32 %v1122, %v1203
        %v1215 = vadd.f32 %v1179, %v1207
        %v1216 = vpack.c.bf16 %v1212, %v1212
        %v1217 = vpack.c.bf16 %v1213, %v1213
        %v1218 = vpack.c.bf16 %v1214, %v1214
        %v1219 = vpack.c.bf16 %v1215, %v1215
        %v1220 = vld [vmem:[%s9] sm:$0xf]
        %v1221 = vld [vmem:[%s9 + $0x4] sm:$0xf]
        %v1222 = vld [vmem:[%s9 + $0x8] sm:$0xf]
        %v1223 = vld [vmem:[%s9 + $0xc] sm:$0xf]
        %v1228 = vunpack.c.l.b16 %v1220
        %v1229 = vunpack.c.l.b16 %v1221
        %v1230 = vunpack.c.l.b16 %v1222
        %v1231 = vunpack.c.l.b16 %v1223
        %v1232 = vpack.c.b16 %v1229, %v1228
        %v1233 = vpack.c.b16 %v1231, %v1230
        %1236 = vmatprep.subr.bf16.mxu0 0
        %1237 = vmatpush1.bf16.msra.mxu0 %v1232
        %1238 = vmatprep.subr.bf16.mxu0 0
        %1239 = vmatpush1.bf16.msra.mxu0 %v1233
        %1240 = vmatprep.subr.bf16.mxu0 0
        %1241 = vmatpush1.bf16.msra.mxu0 0
        %1242 = vmatprep.subr.bf16.mxu0 0
        %1243 = vmatpush1.bf16.msra.mxu0 0
        %1244 = vmatprep.subr.bf16.mxu0 0
        %1245 = vmatpush1.bf16.msra.mxu0 0
        %1246 = vmatprep.subr.bf16.mxu0 0
        %1247 = vmatpush1.bf16.msra.mxu0 0
        %1248 = vmatprep.subr.bf16.mxu0 0
        %1249 = vmatpush1.bf16.msra.mxu0 0
        %1250 = vmatprep.subr.bf16.mxu0 0
        %1251 = vmatpush1.bf16.msra.mxu0 0
        %1252 = vmatprep.subr.bf16.mxu0 0
        %1253 = vmatpush1.bf16.msra.mxu0 0
        %1254 = vmatprep.subr.bf16.mxu0 0
        %1255 = vmatpush1.bf16.msra.mxu0 0
        %1256 = vmatprep.subr.bf16.mxu0 0
        %1257 = vmatpush1.bf16.msra.mxu0 0
        %1258 = vmatprep.subr.bf16.mxu0 0
        %1259 = vmatpush1.bf16.msra.mxu0 0
        %1260 = vmatprep.subr.bf16.mxu0 0
        %1261 = vmatpush1.bf16.msra.mxu0 0
        %1262 = vmatprep.subr.bf16.mxu0 0
        %1263 = vmatpush1.bf16.msra.mxu0 0
        %1264 = vmatprep.subr.bf16.mxu0 0
        %1265 = vmatpush1.bf16.msra.mxu0 0
        %1266 = vmatprep.subr.bf16.mxu0 0
        %1267 = vmatpush1.bf16.msra.mxu0 0
        %1268 = vmatprep.mubr.bf16.mxu0 0
        %1269 = vmatmul.mubr.bf16.gmra.mrb[0].mxu0 %v708
        %v1270 = vpop.f32.mrb[0].mxu0
        %v1271 = vadd.f32 0.0, %v1270
        %v1272 = vpop.f32.mrb[0].mxu0
        %v1273 = vpop.f32.mrb[0].mxu0
        %v1274 = vpop.f32.mrb[0].mxu0
        %1275 = vdwg.mxu0
        %s1276 = scalar_lea.vmem %s9, 16
        %v1277 = vld [vmem:[%s1276] sm:$0xf]
        %v1278 = vld [vmem:[%s1276 + $0x4] sm:$0xf]
        %v1279 = vld [vmem:[%s1276 + $0x8] sm:$0xf]
        %v1280 = vld [vmem:[%s1276 + $0xc] sm:$0xf]
        %v1285 = vunpack.c.l.b16 %v1277
        %v1286 = vunpack.c.l.b16 %v1278
        %v1287 = vunpack.c.l.b16 %v1279
        %v1288 = vunpack.c.l.b16 %v1280
        %v1289 = vpack.c.b16 %v1286, %v1285
        %v1290 = vpack.c.b16 %v1288, %v1287
        %1293 = vmatprep.subr.bf16.mxu0 0
        %1294 = vmatpush1.bf16.msra.mxu0 %v1289
        %1295 = vmatprep.subr.bf16.mxu0 0
        %1296 = vmatpush1.bf16.msra.mxu0 %v1290
        %1297 = vmatprep.subr.bf16.mxu0 0
        %1298 = vmatpush1.bf16.msra.mxu0 0
        %1299 = vmatprep.subr.bf16.mxu0 0
        %1300 = vmatpush1.bf16.msra.mxu0 0
        %1301 = vmatprep.subr.bf16.mxu0 0
        %1302 = vmatpush1.bf16.msra.mxu0 0
        %1303 = vmatprep.subr.bf16.mxu0 0
        %1304 = vmatpush1.bf16.msra.mxu0 0
        %1305 = vmatprep.subr.bf16.mxu0 0
        %1306 = vmatpush1.bf16.msra.mxu0 0
        %1307 = vmatprep.subr.bf16.mxu0 0
        %1308 = vmatpush1.bf16.msra.mxu0 0
        %1309 = vmatprep.subr.bf16.mxu0 0
        %1310 = vmatpush1.bf16.msra.mxu0 0
        %1311 = vmatprep.subr.bf16.mxu0 0
        %1312 = vmatpush1.bf16.msra.mxu0 0
        %1313 = vmatprep.subr.bf16.mxu0 0
        %1314 = vmatpush1.bf16.msra.mxu0 0
        %1315 = vmatprep.subr.bf16.mxu0 0
        %1316 = vmatpush1.bf16.msra.mxu0 0
        %1317 = vmatprep.subr.bf16.mxu0 0
        %1318 = vmatpush1.bf16.msra.mxu0 0
        %1319 = vmatprep.subr.bf16.mxu0 0
        %1320 = vmatpush1.bf16.msra.mxu0 0
        %1321 = vmatprep.subr.bf16.mxu0 0
        %1322 = vmatpush1.bf16.msra.mxu0 0
        %1323 = vmatprep.subr.bf16.mxu0 0
        %1324 = vmatpush1.bf16.msra.mxu0 0
        %1325 = vmatprep.mubr.bf16.mxu0 0
        %1326 = vmatmul.mubr.bf16.gmra.mrb[0].mxu0 %v708
        %v1327 = vpop.f32.mrb[0].mxu0
        %v1328 = vadd.f32 0.0, %v1327
        %v1329 = vpop.f32.mrb[0].mxu0
        %v1330 = vpop.f32.mrb[0].mxu0
        %v1331 = vpop.f32.mrb[0].mxu0
        %1332 = vdwg.mxu0
        %s1333 = scalar_lea.vmem %s9, 32
        %v1334 = vld [vmem:[%s1333] sm:$0xf]
        %v1335 = vld [vmem:[%s1333 + $0x4] sm:$0xf]
        %v1336 = vld [vmem:[%s1333 + $0x8] sm:$0xf]
        %v1337 = vld [vmem:[%s1333 + $0xc] sm:$0xf]
        %v1342 = vunpack.c.l.b16 %v1334
        %v1343 = vunpack.c.l.b16 %v1335
        %v1344 = vunpack.c.l.b16 %v1336
        %v1345 = vunpack.c.l.b16 %v1337
        %v1346 = vpack.c.b16 %v1343, %v1342
        %v1347 = vpack.c.b16 %v1345, %v1344
        %1350 = vmatprep.subr.bf16.mxu0 0
        %1351 = vmatpush1.bf16.msra.mxu0 %v1346
        %1352 = vmatprep.subr.bf16.mxu0 0
        %1353 = vmatpush1.bf16.msra.mxu0 %v1347
        %1354 = vmatprep.subr.bf16.mxu0 0
        %1355 = vmatpush1.bf16.msra.mxu0 0
        %1356 = vmatprep.subr.bf16.mxu0 0
        %1357 = vmatpush1.bf16.msra.mxu0 0
        %1358 = vmatprep.subr.bf16.mxu0 0
        %1359 = vmatpush1.bf16.msra.mxu0 0
        %1360 = vmatprep.subr.bf16.mxu0 0
        %1361 = vmatpush1.bf16.msra.mxu0 0
        %1362 = vmatprep.subr.bf16.mxu0 0
        %1363 = vmatpush1.bf16.msra.mxu0 0
        %1364 = vmatprep.subr.bf16.mxu0 0
        %1365 = vmatpush1.bf16.msra.mxu0 0
        %1366 = vmatprep.subr.bf16.mxu0 0
        %1367 = vmatpush1.bf16.msra.mxu0 0
        %1368 = vmatprep.subr.bf16.mxu0 0
        %1369 = vmatpush1.bf16.msra.mxu0 0
        %1370 = vmatprep.subr.bf16.mxu0 0
        %1371 = vmatpush1.bf16.msra.mxu0 0
        %1372 = vmatprep.subr.bf16.mxu0 0
        %1373 = vmatpush1.bf16.msra.mxu0 0
        %1374 = vmatprep.subr.bf16.mxu0 0
        %1375 = vmatpush1.bf16.msra.mxu0 0
        %1376 = vmatprep.subr.bf16.mxu0 0
        %1377 = vmatpush1.bf16.msra.mxu0 0
        %1378 = vmatprep.subr.bf16.mxu0 0
        %1379 = vmatpush1.bf16.msra.mxu0 0
        %1380 = vmatprep.subr.bf16.mxu0 0
        %1381 = vmatpush1.bf16.msra.mxu0 0
        %1382 = vmatprep.mubr.bf16.mxu0 0
        %1383 = vmatmul.mubr.bf16.gmra.mrb[0].mxu0 %v708
        %v1384 = vpop.f32.mrb[0].mxu0
        %v1385 = vadd.f32 0.0, %v1384
        %v1386 = vpop.f32.mrb[0].mxu0
        %v1387 = vpop.f32.mrb[0].mxu0
        %v1388 = vpop.f32.mrb[0].mxu0
        %1389 = vdwg.mxu0
        %s1390 = scalar_lea.vmem %s9, 48
        %v1391 = vld [vmem:[%s1390] sm:$0xf]
        %v1392 = vld [vmem:[%s1390 + $0x4] sm:$0xf]
        %v1393 = vld [vmem:[%s1390 + $0x8] sm:$0xf]
        %v1394 = vld [vmem:[%s1390 + $0xc] sm:$0xf]
        %v1399 = vunpack.c.l.b16 %v1391
        %v1400 = vunpack.c.l.b16 %v1392
        %v1401 = vunpack.c.l.b16 %v1393
        %v1402 = vunpack.c.l.b16 %v1394
        %v1403 = vpack.c.b16 %v1400, %v1399
        %v1404 = vpack.c.b16 %v1402, %v1401
        %1407 = vmatprep.subr.bf16.mxu0 0
        %1408 = vmatpush1.bf16.msra.mxu0 %v1403
        %1409 = vmatprep.subr.bf16.mxu0 0
        %1410 = vmatpush1.bf16.msra.mxu0 %v1404
        %1411 = vmatprep.subr.bf16.mxu0 0
        %1412 = vmatpush1.bf16.msra.mxu0 0
        %1413 = vmatprep.subr.bf16.mxu0 0
        %1414 = vmatpush1.bf16.msra.mxu0 0
        %1415 = vmatprep.subr.bf16.mxu0 0
        %1416 = vmatpush1.bf16.msra.mxu0 0
        %1417 = vmatprep.subr.bf16.mxu0 0
        %1418 = vmatpush1.bf16.msra.mxu0 0
        %1419 = vmatprep.subr.bf16.mxu0 0
        %1420 = vmatpush1.bf16.msra.mxu0 0
        %1421 = vmatprep.subr.bf16.mxu0 0
        %1422 = vmatpush1.bf16.msra.mxu0 0
        %1423 = vmatprep.subr.bf16.mxu0 0
        %1424 = vmatpush1.bf16.msra.mxu0 0
        %1425 = vmatprep.subr.bf16.mxu0 0
        %1426 = vmatpush1.bf16.msra.mxu0 0
        %1427 = vmatprep.subr.bf16.mxu0 0
        %1428 = vmatpush1.bf16.msra.mxu0 0
        %1429 = vmatprep.subr.bf16.mxu0 0
        %1430 = vmatpush1.bf16.msra.mxu0 0
        %1431 = vmatprep.subr.bf16.mxu0 0
        %1432 = vmatpush1.bf16.msra.mxu0 0
        %1433 = vmatprep.subr.bf16.mxu0 0
        %1434 = vmatpush1.bf16.msra.mxu0 0
        %1435 = vmatprep.subr.bf16.mxu0 0
        %1436 = vmatpush1.bf16.msra.mxu0 0
        %1437 = vmatprep.subr.bf16.mxu0 0
        %1438 = vmatpush1.bf16.msra.mxu0 0
        %1439 = vmatprep.mubr.bf16.mxu0 0
        %1440 = vmatmul.mubr.bf16.gmra.mrb[0].mxu0 %v708
        %v1441 = vpop.f32.mrb[0].mxu0
        %v1442 = vadd.f32 0.0, %v1441
        %v1443 = vpop.f32.mrb[0].mxu0
        %v1444 = vpop.f32.mrb[0].mxu0
        %v1445 = vpop.f32.mrb[0].mxu0
        %1446 = vdwg.mxu0
        %v1447 = vld [vmem:[%s10] sm:$0x1]
        %v1448 = vld [vmem:[%s10 + $0x1] sm:$0x1]
        %v1449 = vld [vmem:[%s10 + $0x2] sm:$0x1]
        %v1450 = vld [vmem:[%s10 + $0x3] sm:$0x1]
        %v1455 = vlaneseq
        %v1456 = vshrl.u32 %v1455, 7
        %v1457 = vsub.s32 0, %v1456
        %v1458 = vrot.slane %v1447, %v1457
        %v1459 = vlaneseq
        %v1460 = vshrl.u32 %v1459, 7
        %v1461 = vsub.s32 0, %v1460
        %v1462 = vrot.slane %v1448, %v1461
        %v1463 = vlaneseq
        %v1464 = vshrl.u32 %v1463, 7
        %v1465 = vsub.s32 0, %v1464
        %v1466 = vrot.slane %v1449, %v1465
        %v1467 = vlaneseq
        %v1468 = vshrl.u32 %v1467, 7
        %v1469 = vsub.s32 0, %v1468
        %v1470 = vrot.slane %v1450, %v1469
        %v1475 = vadd.f32 %v1271, %v1458
        %v1476 = vadd.f32 %v1328, %v1462
        %v1477 = vadd.f32 %v1385, %v1466
        %v1478 = vadd.f32 %v1442, %v1470
        %v1479 = vpack.c.bf16 %v1475, %v1475
        %v1480 = vpack.c.bf16 %v1476, %v1476
        %v1481 = vpack.c.bf16 %v1477, %v1477
        %v1482 = vpack.c.bf16 %v1478, %v1478
        %vm1483 = vcmask 64512
        %v1485 = vsel %vm1483, %v953, 0
        %v1488 = vsel %vm1483, %v1216, 0
        %1490 = vmatprep.subr.bf16.mxu0 0
        %1491 = vmatpush1.bf16.xpose.msra.mxu0 %v1488
        %1492 = vmatprep.subr.bf16.mxu0 0
        %1493 = vmatpush1.bf16.xpose.msra.mxu0 0
        %1494 = vmatprep.subr.bf16.mxu0 0
        %1495 = vmatpush1.bf16.xpose.msra.mxu0 0
        %1496 = vmatprep.subr.bf16.mxu0 0
        %1497 = vmatpush1.bf16.xpose.msra.mxu0 0
        %1498 = vmatprep.subr.bf16.mxu0 0
        %1499 = vmatpush1.bf16.xpose.msra.mxu0 0
        %1500 = vmatprep.subr.bf16.mxu0 0
        %1501 = vmatpush1.bf16.xpose.msra.mxu0 0
        %1502 = vmatprep.subr.bf16.mxu0 0
        %1503 = vmatpush1.bf16.xpose.msra.mxu0 0
        %1504 = vmatprep.subr.bf16.mxu0 0
        %1505 = vmatpush1.bf16.xpose.msra.mxu0 0
        %1506 = vmatprep.subr.bf16.mxu0 0
        %1507 = vmatpush1.bf16.xpose.msra.mxu0 0
        %1508 = vmatprep.subr.bf16.mxu0 0
        %1509 = vmatpush1.bf16.xpose.msra.mxu0 0
        %1510 = vmatprep.subr.bf16.mxu0 0
        %1511 = vmatpush1.bf16.xpose.msra.mxu0 0
        %1512 = vmatprep.subr.bf16.mxu0 0
        %1513 = vmatpush1.bf16.xpose.msra.mxu0 0
        %1514 = vmatprep.subr.bf16.mxu0 0
        %1515 = vmatpush1.bf16.xpose.msra.mxu0 0
        %1516 = vmatprep.subr.bf16.mxu0 0
        %1517 = vmatpush1.bf16.xpose.msra.mxu0 0
        %1518 = vmatprep.subr.bf16.mxu0 0
        %1519 = vmatpush1.bf16.xpose.msra.mxu0 0
        %1520 = vmatprep.subr.bf16.mxu0 0
        %1521 = vmatpush1.bf16.xpose.msra.mxu0 0
        %1522 = vmatprep.mubr.bf16.mxu0 0
        %1523 = vmatmul.mubr.bf16.gmra.mrb[0].mxu0 %v1485
        %v1524 = vpop.f32.mrb[0].mxu0
        %v1525 = vadd.f32 0.0, %v1524
        %v1526 = vpop.f32.mrb[0].mxu0
        %v1527 = vpop.f32.mrb[0].mxu0
        %v1528 = vpop.f32.mrb[0].mxu0
        %1529 = vdwg.mxu0
        %v1531 = vsel %vm1483, %v954, 0
        %v1534 = vsel %vm1483, %v1217, 0
        %1536 = vmatprep.subr.bf16.mxu0 0
        %1537 = vmatpush1.bf16.xpose.msra.mxu0 %v1534
        %1538 = vmatprep.subr.bf16.mxu0 0
        %1539 = vmatpush1.bf16.xpose.msra.mxu0 0
        %1540 = vmatprep.subr.bf16.mxu0 0
        %1541 = vmatpush1.bf16.xpose.msra.mxu0 0
        %1542 = vmatprep.subr.bf16.mxu0 0
        %1543 = vmatpush1.bf16.xpose.msra.mxu0 0
        %1544 = vmatprep.subr.bf16.mxu0 0
        %1545 = vmatpush1.bf16.xpose.msra.mxu0 0
        %1546 = vmatprep.subr.bf16.mxu0 0
        %1547 = vmatpush1.bf16.xpose.msra.mxu0 0
        %1548 = vmatprep.subr.bf16.mxu0 0
        %1549 = vmatpush1.bf16.xpose.msra.mxu0 0
        %1550 = vmatprep.subr.bf16.mxu0 0
        %1551 = vmatpush1.bf16.xpose.msra.mxu0 0
        %1552 = vmatprep.subr.bf16.mxu0 0
        %1553 = vmatpush1.bf16.xpose.msra.mxu0 0
        %1554 = vmatprep.subr.bf16.mxu0 0
        %1555 = vmatpush1.bf16.xpose.msra.mxu0 0
        %1556 = vmatprep.subr.bf16.mxu0 0
        %1557 = vmatpush1.bf16.xpose.msra.mxu0 0
        %1558 = vmatprep.subr.bf16.mxu0 0
        %1559 = vmatpush1.bf16.xpose.msra.mxu0 0
        %1560 = vmatprep.subr.bf16.mxu0 0
        %1561 = vmatpush1.bf16.xpose.msra.mxu0 0
        %1562 = vmatprep.subr.bf16.mxu0 0
        %1563 = vmatpush1.bf16.xpose.msra.mxu0 0
        %1564 = vmatprep.subr.bf16.mxu0 0
        %1565 = vmatpush1.bf16.xpose.msra.mxu0 0
        %1566 = vmatprep.subr.bf16.mxu0 0
        %1567 = vmatpush1.bf16.xpose.msra.mxu0 0
        %1568 = vmatprep.mubr.bf16.mxu0 0
        %1569 = vmatmul.mubr.bf16.gmra.mrb[0].mxu0 %v1531
        %v1570 = vpop.f32.mrb[0].mxu0
        %v1571 = vadd.f32 0.0, %v1570
        %v1572 = vpop.f32.mrb[0].mxu0
        %v1573 = vpop.f32.mrb[0].mxu0
        %v1574 = vpop.f32.mrb[0].mxu0
        %1575 = vdwg.mxu0
        %v1577 = vsel %vm1483, %v955, 0
        %v1580 = vsel %vm1483, %v1218, 0
        %1582 = vmatprep.subr.bf16.mxu0 0
        %1583 = vmatpush1.bf16.xpose.msra.mxu0 %v1580
        %1584 = vmatprep.subr.bf16.mxu0 0
        %1585 = vmatpush1.bf16.xpose.msra.mxu0 0
        %1586 = vmatprep.subr.bf16.mxu0 0
        %1587 = vmatpush1.bf16.xpose.msra.mxu0 0
        %1588 = vmatprep.subr.bf16.mxu0 0
        %1589 = vmatpush1.bf16.xpose.msra.mxu0 0
        %1590 = vmatprep.subr.bf16.mxu0 0
        %1591 = vmatpush1.bf16.xpose.msra.mxu0 0
        %1592 = vmatprep.subr.bf16.mxu0 0
        %1593 = vmatpush1.bf16.xpose.msra.mxu0 0
        %1594 = vmatprep.subr.bf16.mxu0 0
        %1595 = vmatpush1.bf16.xpose.msra.mxu0 0
        %1596 = vmatprep.subr.bf16.mxu0 0
        %1597 = vmatpush1.bf16.xpose.msra.mxu0 0
        %1598 = vmatprep.subr.bf16.mxu0 0
        %1599 = vmatpush1.bf16.xpose.msra.mxu0 0
        %1600 = vmatprep.subr.bf16.mxu0 0
        %1601 = vmatpush1.bf16.xpose.msra.mxu0 0
        %1602 = vmatprep.subr.bf16.mxu0 0
        %1603 = vmatpush1.bf16.xpose.msra.mxu0 0
        %1604 = vmatprep.subr.bf16.mxu0 0
        %1605 = vmatpush1.bf16.xpose.msra.mxu0 0
        %1606 = vmatprep.subr.bf16.mxu0 0
        %1607 = vmatpush1.bf16.xpose.msra.mxu0 0
        %1608 = vmatprep.subr.bf16.mxu0 0
        %1609 = vmatpush1.bf16.xpose.msra.mxu0 0
        %1610 = vmatprep.subr.bf16.mxu0 0
        %1611 = vmatpush1.bf16.xpose.msra.mxu0 0
        %1612 = vmatprep.subr.bf16.mxu0 0
        %1613 = vmatpush1.bf16.xpose.msra.mxu0 0
        %1614 = vmatprep.mubr.bf16.mxu0 0
        %1615 = vmatmul.mubr.bf16.gmra.mrb[0].mxu0 %v1577
        %v1616 = vpop.f32.mrb[0].mxu0
        %v1617 = vadd.f32 0.0, %v1616
        %v1618 = vpop.f32.mrb[0].mxu0
        %v1619 = vpop.f32.mrb[0].mxu0
        %v1620 = vpop.f32.mrb[0].mxu0
        %1621 = vdwg.mxu0
        %v1623 = vsel %vm1483, %v956, 0
        %v1626 = vsel %vm1483, %v1219, 0
        %1628 = vmatprep.subr.bf16.mxu0 0
        %1629 = vmatpush1.bf16.xpose.msra.mxu0 %v1626
        %1630 = vmatprep.subr.bf16.mxu0 0
        %1631 = vmatpush1.bf16.xpose.msra.mxu0 0
        %1632 = vmatprep.subr.bf16.mxu0 0
        %1633 = vmatpush1.bf16.xpose.msra.mxu0 0
        %1634 = vmatprep.subr.bf16.mxu0 0
        %1635 = vmatpush1.bf16.xpose.msra.mxu0 0
        %1636 = vmatprep.subr.bf16.mxu0 0
        %1637 = vmatpush1.bf16.xpose.msra.mxu0 0
        %1638 = vmatprep.subr.bf16.mxu0 0
        %1639 = vmatpush1.bf16.xpose.msra.mxu0 0
        %1640 = vmatprep.subr.bf16.mxu0 0
        %1641 = vmatpush1.bf16.xpose.msra.mxu0 0
        %1642 = vmatprep.subr.bf16.mxu0 0
        %1643 = vmatpush1.bf16.xpose.msra.mxu0 0
        %1644 = vmatprep.subr.bf16.mxu0 0
        %1645 = vmatpush1.bf16.xpose.msra.mxu0 0
        %1646 = vmatprep.subr.bf16.mxu0 0
        %1647 = vmatpush1.bf16.xpose.msra.mxu0 0
        %1648 = vmatprep.subr.bf16.mxu0 0
        %1649 = vmatpush1.bf16.xpose.msra.mxu0 0
        %1650 = vmatprep.subr.bf16.mxu0 0
        %1651 = vmatpush1.bf16.xpose.msra.mxu0 0
        %1652 = vmatprep.subr.bf16.mxu0 0
        %1653 = vmatpush1.bf16.xpose.msra.mxu0 0
        %1654 = vmatprep.subr.bf16.mxu0 0
        %1655 = vmatpush1.bf16.xpose.msra.mxu0 0
        %1656 = vmatprep.subr.bf16.mxu0 0
        %1657 = vmatpush1.bf16.xpose.msra.mxu0 0
        %1658 = vmatprep.subr.bf16.mxu0 0
        %1659 = vmatpush1.bf16.xpose.msra.mxu0 0
        %1660 = vmatprep.mubr.bf16.mxu0 0
        %1661 = vmatmul.mubr.bf16.gmra.mrb[0].mxu0 %v1623
        %v1662 = vpop.f32.mrb[0].mxu0
        %v1663 = vadd.f32 0.0, %v1662
        %v1664 = vpop.f32.mrb[0].mxu0
        %v1665 = vpop.f32.mrb[0].mxu0
        %v1666 = vpop.f32.mrb[0].mxu0
        %1667 = vdwg.mxu0
        %v1668 = vsel %vm1483, %v1525, -inf
        %1669 = vmax.xlane.f32.xlu0 %v1668
        %v1670 = vpop.xlane.xlu0 %1669
        %v1671 = vsel %vm1483, %v1571, -inf
        %1672 = vmax.xlane.f32.xlu0 %v1671
        %v1673 = vpop.xlane.xlu0 %1672
        %v1674 = vsel %vm1483, %v1617, -inf
        %1675 = vmax.xlane.f32.xlu0 %v1674
        %v1676 = vpop.xlane.xlu0 %1675
        %v1677 = vsel %vm1483, %v1663, -inf
        %1678 = vmax.xlane.f32.xlu0 %v1677
        %v1679 = vpop.xlane.xlu0 %1678
        %v1680 = vsub.f32 %v1525, %v1670
        %v1681 = vsub.f32 %v1571, %v1673
        %v1682 = vsub.f32 %v1617, %v1676
        %v1683 = vsub.f32 %v1663, %v1679
        %v1684 = vmul.f32 %v1680, 1.442695
        %v1685 = vpow.pop %v1684
        %v1686 = vmul.f32 %v1681, 1.442695
        %v1687 = vpow.pop %v1686
        %v1688 = vmul.f32 %v1682, 1.442695
        %v1689 = vpow.pop %v1688
        %v1690 = vmul.f32 %v1683, 1.442695
        %v1691 = vpow.pop %v1690
        %v1692 = vsel %vm1483, %v1685, 0.0
        %1693 = vadd.xlane.f32.xlu0 %v1692
        %v1694 = vpop.xlane.xlu0 %1693
        %v1695 = vsel %vm1483, %v1687, 0.0
        %1696 = vadd.xlane.f32.xlu0 %v1695
        %v1697 = vpop.xlane.xlu0 %1696
        %v1698 = vsel %vm1483, %v1689, 0.0
        %1699 = vadd.xlane.f32.xlu0 %v1698
        %v1700 = vpop.xlane.xlu0 %1699
        %v1701 = vsel %vm1483, %v1691, 0.0
        %1702 = vadd.xlane.f32.xlu0 %v1701
        %v1703 = vpop.xlane.xlu0 %1702
        %v1704 = vpack.c.bf16 %v1685, %v1685
        %v1705 = vpack.c.bf16 %v1687, %v1687
        %v1706 = vpack.c.bf16 %v1689, %v1689
        %v1707 = vpack.c.bf16 %v1691, %v1691
        %v1709 = vsel %vm1483, %v1704, 0
        %vm1711 = vcmask 1043456
        %v1713 = vsel %vm1711, %v1479, 0
        %1715 = vmatprep.subr.bf16.mxu0 0
        %1716 = vmatpush1.bf16.msra.mxu0 %v1713
        %1717 = vmatprep.subr.bf16.mxu0 0
        %1718 = vmatpush1.bf16.msra.mxu0 0
        %1719 = vmatprep.subr.bf16.mxu0 0
        %1720 = vmatpush1.bf16.msra.mxu0 0
        %1721 = vmatprep.subr.bf16.mxu0 0
        %1722 = vmatpush1.bf16.msra.mxu0 0
        %1723 = vmatprep.subr.bf16.mxu0 0
        %1724 = vmatpush1.bf16.msra.mxu0 0
        %1725 = vmatprep.subr.bf16.mxu0 0
        %1726 = vmatpush1.bf16.msra.mxu0 0
        %1727 = vmatprep.subr.bf16.mxu0 0
        %1728 = vmatpush1.bf16.msra.mxu0 0
        %1729 = vmatprep.subr.bf16.mxu0 0
        %1730 = vmatpush1.bf16.msra.mxu0 0
        %1731 = vmatprep.subr.bf16.mxu0 0
        %1732 = vmatpush1.bf16.msra.mxu0 0
        %1733 = vmatprep.subr.bf16.mxu0 0
        %1734 = vmatpush1.bf16.msra.mxu0 0
        %1735 = vmatprep.subr.bf16.mxu0 0
        %1736 = vmatpush1.bf16.msra.mxu0 0
        %1737 = vmatprep.subr.bf16.mxu0 0
        %1738 = vmatpush1.bf16.msra.mxu0 0
        %1739 = vmatprep.subr.bf16.mxu0 0
        %1740 = vmatpush1.bf16.msra.mxu0 0
        %1741 = vmatprep.subr.bf16.mxu0 0
        %1742 = vmatpush1.bf16.msra.mxu0 0
        %1743 = vmatprep.subr.bf16.mxu0 0
        %1744 = vmatpush1.bf16.msra.mxu0 0
        %1745 = vmatprep.subr.bf16.mxu0 0
        %1746 = vmatpush1.bf16.msra.mxu0 0
        %1747 = vmatprep.mubr.bf16.mxu0 0
        %1748 = vmatmul.mubr.bf16.gmra.mrb[0].mxu0 %v1709
        %v1749 = vpop.f32.mrb[0].mxu0
        %v1750 = vadd.f32 0.0, %v1749
        %v1751 = vpop.f32.mrb[0].mxu0
        %v1752 = vpop.f32.mrb[0].mxu0
        %v1753 = vpop.f32.mrb[0].mxu0
        %1754 = vdwg.mxu0
        %v1756 = vsel %vm1483, %v1705, 0
        %v1759 = vsel %vm1711, %v1480, 0
        %1761 = vmatprep.subr.bf16.mxu0 0
        %1762 = vmatpush1.bf16.msra.mxu0 %v1759
        %1763 = vmatprep.subr.bf16.mxu0 0
        %1764 = vmatpush1.bf16.msra.mxu0 0
        %1765 = vmatprep.subr.bf16.mxu0 0
        %1766 = vmatpush1.bf16.msra.mxu0 0
        %1767 = vmatprep.subr.bf16.mxu0 0
        %1768 = vmatpush1.bf16.msra.mxu0 0
        %1769 = vmatprep.subr.bf16.mxu0 0
        %1770 = vmatpush1.bf16.msra.mxu0 0
        %1771 = vmatprep.subr.bf16.mxu0 0
        %1772 = vmatpush1.bf16.msra.mxu0 0
        %1773 = vmatprep.subr.bf16.mxu0 0
        %1774 = vmatpush1.bf16.msra.mxu0 0
        %1775 = vmatprep.subr.bf16.mxu0 0
        %1776 = vmatpush1.bf16.msra.mxu0 0
        %1777 = vmatprep.subr.bf16.mxu0 0
        %1778 = vmatpush1.bf16.msra.mxu0 0
        %1779 = vmatprep.subr.bf16.mxu0 0
        %1780 = vmatpush1.bf16.msra.mxu0 0
        %1781 = vmatprep.subr.bf16.mxu0 0
        %1782 = vmatpush1.bf16.msra.mxu0 0
        %1783 = vmatprep.subr.bf16.mxu0 0
        %1784 = vmatpush1.bf16.msra.mxu0 0
        %1785 = vmatprep.subr.bf16.mxu0 0
        %1786 = vmatpush1.bf16.msra.mxu0 0
        %1787 = vmatprep.subr.bf16.mxu0 0
        %1788 = vmatpush1.bf16.msra.mxu0 0
        %1789 = vmatprep.subr.bf16.mxu0 0
        %1790 = vmatpush1.bf16.msra.mxu0 0
        %1791 = vmatprep.subr.bf16.mxu0 0
        %1792 = vmatpush1.bf16.msra.mxu0 0
        %1793 = vmatprep.mubr.bf16.mxu0 0
        %1794 = vmatmul.mubr.bf16.gmra.mrb[0].mxu0 %v1756
        %v1795 = vpop.f32.mrb[0].mxu0
        %v1796 = vadd.f32 0.0, %v1795
        %v1797 = vpop.f32.mrb[0].mxu0
        %v1798 = vpop.f32.mrb[0].mxu0
        %v1799 = vpop.f32.mrb[0].mxu0
        %1800 = vdwg.mxu0
        %v1802 = vsel %vm1483, %v1706, 0
        %v1805 = vsel %vm1711, %v1481, 0
        %1807 = vmatprep.subr.bf16.mxu0 0
        %1808 = vmatpush1.bf16.msra.mxu0 %v1805
        %1809 = vmatprep.subr.bf16.mxu0 0
        %1810 = vmatpush1.bf16.msra.mxu0 0
        %1811 = vmatprep.subr.bf16.mxu0 0
        %1812 = vmatpush1.bf16.msra.mxu0 0
        %1813 = vmatprep.subr.bf16.mxu0 0
        %1814 = vmatpush1.bf16.msra.mxu0 0
        %1815 = vmatprep.subr.bf16.mxu0 0
        %1816 = vmatpush1.bf16.msra.mxu0 0
        %1817 = vmatprep.subr.bf16.mxu0 0
        %1818 = vmatpush1.bf16.msra.mxu0 0
        %1819 = vmatprep.subr.bf16.mxu0 0
        %1820 = vmatpush1.bf16.msra.mxu0 0
        %1821 = vmatprep.subr.bf16.mxu0 0
        %1822 = vmatpush1.bf16.msra.mxu0 0
        %1823 = vmatprep.subr.bf16.mxu0 0
        %1824 = vmatpush1.bf16.msra.mxu0 0
        %1825 = vmatprep.subr.bf16.mxu0 0
        %1826 = vmatpush1.bf16.msra.mxu0 0
        %1827 = vmatprep.subr.bf16.mxu0 0
        %1828 = vmatpush1.bf16.msra.mxu0 0
        %1829 = vmatprep.subr.bf16.mxu0 0
        %1830 = vmatpush1.bf16.msra.mxu0 0
        %1831 = vmatprep.subr.bf16.mxu0 0
        %1832 = vmatpush1.bf16.msra.mxu0 0
        %1833 = vmatprep.subr.bf16.mxu0 0
        %1834 = vmatpush1.bf16.msra.mxu0 0
        %1835 = vmatprep.subr.bf16.mxu0 0
        %1836 = vmatpush1.bf16.msra.mxu0 0
        %1837 = vmatprep.subr.bf16.mxu0 0
        %1838 = vmatpush1.bf16.msra.mxu0 0
        %1839 = vmatprep.mubr.bf16.mxu0 0
        %1840 = vmatmul.mubr.bf16.gmra.mrb[0].mxu0 %v1802
        %v1841 = vpop.f32.mrb[0].mxu0
        %v1842 = vadd.f32 0.0, %v1841
        %v1843 = vpop.f32.mrb[0].mxu0
        %v1844 = vpop.f32.mrb[0].mxu0
        %v1845 = vpop.f32.mrb[0].mxu0
        %1846 = vdwg.mxu0
        %v1848 = vsel %vm1483, %v1707, 0
        %v1851 = vsel %vm1711, %v1482, 0
        %1853 = vmatprep.subr.bf16.mxu0 0
        %1854 = vmatpush1.bf16.msra.mxu0 %v1851
        %1855 = vmatprep.subr.bf16.mxu0 0
        %1856 = vmatpush1.bf16.msra.mxu0 0
        %1857 = vmatprep.subr.bf16.mxu0 0
        %1858 = vmatpush1.bf16.msra.mxu0 0
        %1859 = vmatprep.subr.bf16.mxu0 0
        %1860 = vmatpush1.bf16.msra.mxu0 0
        %1861 = vmatprep.subr.bf16.mxu0 0
        %1862 = vmatpush1.bf16.msra.mxu0 0
        %1863 = vmatprep.subr.bf16.mxu0 0
        %1864 = vmatpush1.bf16.msra.mxu0 0
        %1865 = vmatprep.subr.bf16.mxu0 0
        %1866 = vmatpush1.bf16.msra.mxu0 0
        %1867 = vmatprep.subr.bf16.mxu0 0
        %1868 = vmatpush1.bf16.msra.mxu0 0
        %1869 = vmatprep.subr.bf16.mxu0 0
        %1870 = vmatpush1.bf16.msra.mxu0 0
        %1871 = vmatprep.subr.bf16.mxu0 0
        %1872 = vmatpush1.bf16.msra.mxu0 0
        %1873 = vmatprep.subr.bf16.mxu0 0
        %1874 = vmatpush1.bf16.msra.mxu0 0
        %1875 = vmatprep.subr.bf16.mxu0 0
        %1876 = vmatpush1.bf16.msra.mxu0 0
        %1877 = vmatprep.subr.bf16.mxu0 0
        %1878 = vmatpush1.bf16.msra.mxu0 0
        %1879 = vmatprep.subr.bf16.mxu0 0
        %1880 = vmatpush1.bf16.msra.mxu0 0
        %1881 = vmatprep.subr.bf16.mxu0 0
        %1882 = vmatpush1.bf16.msra.mxu0 0
        %1883 = vmatprep.subr.bf16.mxu0 0
        %1884 = vmatpush1.bf16.msra.mxu0 0
        %1885 = vmatprep.mubr.bf16.mxu0 0
        %1886 = vmatmul.mubr.bf16.gmra.mrb[0].mxu0 %v1848
        %v1887 = vpop.f32.mrb[0].mxu0
        %v1888 = vadd.f32 0.0, %v1887
        %v1889 = vpop.f32.mrb[0].mxu0
        %v1890 = vpop.f32.mrb[0].mxu0
        %v1891 = vpop.f32.mrb[0].mxu0
        %1892 = vdwg.mxu0
        %v1893 = vrcp.pop %v1694
        %v1894 = vrcp.pop %v1697
        %v1895 = vrcp.pop %v1700
        %v1896 = vrcp.pop %v1703
        %v1897 = vmul.f32 %v1750, %v1893
        %v1898 = vmul.f32 %v1796, %v1894
        %v1899 = vmul.f32 %v1842, %v1895
        %v1900 = vmul.f32 %v1888, %v1896
        %v1901 = vpack.c.bf16 %v1897, %v1897
        %v1902 = vpack.c.bf16 %v1898, %v1898
        %v1903 = vpack.c.bf16 %v1899, %v1899
        %v1904 = vpack.c.bf16 %v1900, %v1900
        %v1905 = vld [vmem:[%s11] sm:$0xf]
        %v1906 = vld [vmem:[%s11 + $0x4] sm:$0xf]
        %v1907 = vld [vmem:[%s11 + $0x8] sm:$0xf]
        %v1908 = vld [vmem:[%s11 + $0xc] sm:$0xf]
        %v1910 = vsel %vm1483, %v1901, 0
        %v1913 = vsel %vm1711, %v1905, 0
        %1915 = vmatprep.subr.bf16.mxu0 0
        %1916 = vmatpush1.bf16.msra.mxu0 %v1913
        %1917 = vmatprep.subr.bf16.mxu0 0
        %1918 = vmatpush1.bf16.msra.mxu0 0
        %1919 = vmatprep.subr.bf16.mxu0 0
        %1920 = vmatpush1.bf16.msra.mxu0 0
        %1921 = vmatprep.subr.bf16.mxu0 0
        %1922 = vmatpush1.bf16.msra.mxu0 0
        %1923 = vmatprep.subr.bf16.mxu0 0
        %1924 = vmatpush1.bf16.msra.mxu0 0
        %1925 = vmatprep.subr.bf16.mxu0 0
        %1926 = vmatpush1.bf16.msra.mxu0 0
        %1927 = vmatprep.subr.bf16.mxu0 0
        %1928 = vmatpush1.bf16.msra.mxu0 0
        %1929 = vmatprep.subr.bf16.mxu0 0
        %1930 = vmatpush1.bf16.msra.mxu0 0
        %1931 = vmatprep.subr.bf16.mxu0 0
        %1932 = vmatpush1.bf16.msra.mxu0 0
        %1933 = vmatprep.subr.bf16.mxu0 0
        %1934 = vmatpush1.bf16.msra.mxu0 0
        %1935 = vmatprep.subr.bf16.mxu0 0
        %1936 = vmatpush1.bf16.msra.mxu0 0
        %1937 = vmatprep.subr.bf16.mxu0 0
        %1938 = vmatpush1.bf16.msra.mxu0 0
        %1939 = vmatprep.subr.bf16.mxu0 0
        %1940 = vmatpush1.bf16.msra.mxu0 0
        %1941 = vmatprep.subr.bf16.mxu0 0
        %1942 = vmatpush1.bf16.msra.mxu0 0
        %1943 = vmatprep.subr.bf16.mxu0 0
        %1944 = vmatpush1.bf16.msra.mxu0 0
        %1945 = vmatprep.subr.bf16.mxu0 0
        %1946 = vmatpush1.bf16.msra.mxu0 0
        %1947 = vmatprep.mubr.bf16.mxu0 0
        %1948 = vmatmul.mubr.bf16.gmra.mrb[0].mxu0 %v1910
        %v1949 = vpop.f32.mrb[0].mxu0
        %v1950 = vadd.f32 0.0, %v1949
        %v1951 = vpop.f32.mrb[0].mxu0
        %v1952 = vpop.f32.mrb[0].mxu0
        %v1953 = vpop.f32.mrb[0].mxu0
        %1954 = vdwg.mxu0
        %v1956 = vsel %vm1483, %v1902, 0
        %v1959 = vsel %vm1711, %v1906, 0
        %1961 = vmatprep.subr.bf16.mxu0 0
        %1962 = vmatpush1.bf16.msra.mxu0 %v1959
        %1963 = vmatprep.subr.bf16.mxu0 0
        %1964 = vmatpush1.bf16.msra.mxu0 0
        %1965 = vmatprep.subr.bf16.mxu0 0
        %1966 = vmatpush1.bf16.msra.mxu0 0
        %1967 = vmatprep.subr.bf16.mxu0 0
        %1968 = vmatpush1.bf16.msra.mxu0 0
        %1969 = vmatprep.subr.bf16.mxu0 0
        %1970 = vmatpush1.bf16.msra.mxu0 0
        %1971 = vmatprep.subr.bf16.mxu0 0
        %1972 = vmatpush1.bf16.msra.mxu0 0
        %1973 = vmatprep.subr.bf16.mxu0 0
        %1974 = vmatpush1.bf16.msra.mxu0 0
        %1975 = vmatprep.subr.bf16.mxu0 0
        %1976 = vmatpush1.bf16.msra.mxu0 0
        %1977 = vmatprep.subr.bf16.mxu0 0
        %1978 = vmatpush1.bf16.msra.mxu0 0
        %1979 = vmatprep.subr.bf16.mxu0 0
        %1980 = vmatpush1.bf16.msra.mxu0 0
        %1981 = vmatprep.subr.bf16.mxu0 0
        %1982 = vmatpush1.bf16.msra.mxu0 0
        %1983 = vmatprep.subr.bf16.mxu0 0
        %1984 = vmatpush1.bf16.msra.mxu0 0
        %1985 = vmatprep.subr.bf16.mxu0 0
        %1986 = vmatpush1.bf16.msra.mxu0 0
        %1987 = vmatprep.subr.bf16.mxu0 0
        %1988 = vmatpush1.bf16.msra.mxu0 0
        %1989 = vmatprep.subr.bf16.mxu0 0
        %1990 = vmatpush1.bf16.msra.mxu0 0
        %1991 = vmatprep.subr.bf16.mxu0 0
        %1992 = vmatpush1.bf16.msra.mxu0 0
        %1993 = vmatprep.mubr.bf16.mxu0 0
        %1994 = vmatmul.mubr.bf16.gmra.mrb[0].mxu0 %v1956
        %v1995 = vpop.f32.mrb[0].mxu0
        %v1996 = vadd.f32 0.0, %v1995
        %v1997 = vpop.f32.mrb[0].mxu0
        %v1998 = vpop.f32.mrb[0].mxu0
        %v1999 = vpop.f32.mrb[0].mxu0
        %2000 = vdwg.mxu0
        %v2002 = vsel %vm1483, %v1903, 0
        %v2005 = vsel %vm1711, %v1907, 0
        %2007 = vmatprep.subr.bf16.mxu0 0
        %2008 = vmatpush1.bf16.msra.mxu0 %v2005
        %2009 = vmatprep.subr.bf16.mxu0 0
        %2010 = vmatpush1.bf16.msra.mxu0 0
        %2011 = vmatprep.subr.bf16.mxu0 0
        %2012 = vmatpush1.bf16.msra.mxu0 0
        %2013 = vmatprep.subr.bf16.mxu0 0
        %2014 = vmatpush1.bf16.msra.mxu0 0
        %2015 = vmatprep.subr.bf16.mxu0 0
        %2016 = vmatpush1.bf16.msra.mxu0 0
        %2017 = vmatprep.subr.bf16.mxu0 0
        %2018 = vmatpush1.bf16.msra.mxu0 0
        %2019 = vmatprep.subr.bf16.mxu0 0
        %2020 = vmatpush1.bf16.msra.mxu0 0
        %2021 = vmatprep.subr.bf16.mxu0 0
        %2022 = vmatpush1.bf16.msra.mxu0 0
        %2023 = vmatprep.subr.bf16.mxu0 0
        %2024 = vmatpush1.bf16.msra.mxu0 0
        %2025 = vmatprep.subr.bf16.mxu0 0
        %2026 = vmatpush1.bf16.msra.mxu0 0
        %2027 = vmatprep.subr.bf16.mxu0 0
        %2028 = vmatpush1.bf16.msra.mxu0 0
        %2029 = vmatprep.subr.bf16.mxu0 0
        %2030 = vmatpush1.bf16.msra.mxu0 0
        %2031 = vmatprep.subr.bf16.mxu0 0
        %2032 = vmatpush1.bf16.msra.mxu0 0
        %2033 = vmatprep.subr.bf16.mxu0 0
        %2034 = vmatpush1.bf16.msra.mxu0 0
        %2035 = vmatprep.subr.bf16.mxu0 0
        %2036 = vmatpush1.bf16.msra.mxu0 0
        %2037 = vmatprep.subr.bf16.mxu0 0
        %2038 = vmatpush1.bf16.msra.mxu0 0
        %2039 = vmatprep.mubr.bf16.mxu0 0
        %2040 = vmatmul.mubr.bf16.gmra.mrb[0].mxu0 %v2002
        %v2041 = vpop.f32.mrb[0].mxu0
        %v2042 = vadd.f32 0.0, %v2041
        %v2043 = vpop.f32.mrb[0].mxu0
        %v2044 = vpop.f32.mrb[0].mxu0
        %v2045 = vpop.f32.mrb[0].mxu0
        %2046 = vdwg.mxu0
        %v2048 = vsel %vm1483, %v1904, 0
        %v2051 = vsel %vm1711, %v1908, 0
        %2053 = vmatprep.subr.bf16.mxu0 0
        %2054 = vmatpush1.bf16.msra.mxu0 %v2051
        %2055 = vmatprep.subr.bf16.mxu0 0
        %2056 = vmatpush1.bf16.msra.mxu0 0
        %2057 = vmatprep.subr.bf16.mxu0 0
        %2058 = vmatpush1.bf16.msra.mxu0 0
        %2059 = vmatprep.subr.bf16.mxu0 0
        %2060 = vmatpush1.bf16.msra.mxu0 0
        %2061 = vmatprep.subr.bf16.mxu0 0
        %2062 = vmatpush1.bf16.msra.mxu0 0
        %2063 = vmatprep.subr.bf16.mxu0 0
        %2064 = vmatpush1.bf16.msra.mxu0 0
        %2065 = vmatprep.subr.bf16.mxu0 0
        %2066 = vmatpush1.bf16.msra.mxu0 0
        %2067 = vmatprep.subr.bf16.mxu0 0
        %2068 = vmatpush1.bf16.msra.mxu0 0
        %2069 = vmatprep.subr.bf16.mxu0 0
        %2070 = vmatpush1.bf16.msra.mxu0 0
        %2071 = vmatprep.subr.bf16.mxu0 0
        %2072 = vmatpush1.bf16.msra.mxu0 0
        %2073 = vmatprep.subr.bf16.mxu0 0
        %2074 = vmatpush1.bf16.msra.mxu0 0
        %2075 = vmatprep.subr.bf16.mxu0 0
        %2076 = vmatpush1.bf16.msra.mxu0 0
        %2077 = vmatprep.subr.bf16.mxu0 0
        %2078 = vmatpush1.bf16.msra.mxu0 0
        %2079 = vmatprep.subr.bf16.mxu0 0
        %2080 = vmatpush1.bf16.msra.mxu0 0
        %2081 = vmatprep.subr.bf16.mxu0 0
        %2082 = vmatpush1.bf16.msra.mxu0 0
        %2083 = vmatprep.subr.bf16.mxu0 0
        %2084 = vmatpush1.bf16.msra.mxu0 0
        %2085 = vmatprep.mubr.bf16.mxu0 0
        %2086 = vmatmul.mubr.bf16.gmra.mrb[0].mxu0 %v2048
        %v2087 = vpop.f32.mrb[0].mxu0
        %v2088 = vadd.f32 0.0, %v2087
        %v2089 = vpop.f32.mrb[0].mxu0
        %v2090 = vpop.f32.mrb[0].mxu0
        %v2091 = vpop.f32.mrb[0].mxu0
        %2092 = vdwg.mxu0
        %v2093 = vsel %vm661, %v1950, 0.0
        %v2094 = vsel %vm661, %v1996, 0.0
        %v2095 = vadd.f32 %v2093, %v2094
        %v2096 = vsel %vm661, %v2042, 0.0
        %v2097 = vadd.f32 %v2095, %v2096
        %v2098 = vsel %vm661, %v2088, 0.0
        %v2099 = vadd.f32 %v2097, %v2098
        %v2100 = vld [vmem:[%s12] sm:$0x1]
        %v2102 = vlaneseq
        %v2103 = vshrl.u32 %v2102, 7
        %v2104 = vsub.s32 0, %v2103
        %v2105 = vrot.slane %v2100, %v2104
        %v2107 = vadd.f32 %v2099, %v2105
        %v2108 = vadd.f32 %v2107, %v654
        %v2109 = vld [vmem:[%s13] sm:$0x1]
        %v2110 = vld [vmem:[%s14] sm:$0x1]
        %v2111 = vsel %vm661, %v2108, 0.0
        %2112 = vadd.xlane.f32.xlu0 %v2111
        %v2113 = vpop.xlane.xlu0 %2112
        %v2114 = vmul.f32 %v2113, %v665
        %v2115 = vsub.f32 %v2108, %v2114
        %v2116 = vmul.f32 %v2115, %v2115
        %v2117 = vsel %vm661, %v2116, 0.0
        %2118 = vadd.xlane.f32.xlu0 %v2117
        %v2119 = vpop.xlane.xlu0 %2118
        %v2120 = vmul.f32 %v2119, %v665
        %v2121 = vadd.f32 %v2120, 1e-05
        %v2122 = vrsqrt.pop %v2121
        %v2123 = vmul.f32 %v2115, %v2122
        %v2125 = vlaneseq
        %v2126 = vshrl.u32 %v2125, 7
        %v2127 = vsub.s32 0, %v2126
        %v2128 = vrot.slane %v2109, %v2127
        %v2130 = vmul.f32 %v2123, %v2128
        %v2132 = vlaneseq
        %v2133 = vshrl.u32 %v2132, 7
        %v2134 = vsub.s32 0, %v2133
        %v2135 = vrot.slane %v2110, %v2134
        %v2137 = vadd.f32 %v2130, %v2135
        %v2138 = vpack.c.bf16 %v2137, %v2137
        %v2139 = vld [vmem:[%s15] sm:$0xf]
        %v2140 = vld [vmem:[%s15 + $0x4] sm:$0xf]
        %v2141 = vld [vmem:[%s15 + $0x8] sm:$0xf]
        %v2142 = vld [vmem:[%s15 + $0xc] sm:$0xf]
        %v2143 = vld [vmem:[%s16] sm:$0x1]
        %v2145 = vlaneseq
        %v2146 = vshrl.u32 %v2145, 7
        %v2147 = vsub.s32 0, %v2146
        %v2148 = vrot.slane %v2143, %v2147
        %v2154 = vunpack.c.l.b16 %v2139
        %v2155 = vunpack.c.l.b16 %v2140
        %v2156 = vunpack.c.l.b16 %v2141
        %v2157 = vunpack.c.l.b16 %v2142
        %v2158 = vpack.c.b16 %v2155, %v2154
        %v2159 = vpack.c.b16 %v2157, %v2156
        %v2163 = vsel %vm661, %v2138, 0
        %2165 = vmatprep.subr.bf16.mxu0 0
        %2166 = vmatpush1.bf16.msra.mxu0 %v2158
        %2167 = vmatprep.subr.bf16.mxu0 0
        %2168 = vmatpush1.bf16.msra.mxu0 %v2159
        %2169 = vmatprep.subr.bf16.mxu0 0
        %2170 = vmatpush1.bf16.msra.mxu0 0
        %2171 = vmatprep.subr.bf16.mxu0 0
        %2172 = vmatpush1.bf16.msra.mxu0 0
        %2173 = vmatprep.subr.bf16.mxu0 0
        %2174 = vmatpush1.bf16.msra.mxu0 0
        %2175 = vmatprep.subr.bf16.mxu0 0
        %2176 = vmatpush1.bf16.msra.mxu0 0
        %2177 = vmatprep.subr.bf16.mxu0 0
        %2178 = vmatpush1.bf16.msra.mxu0 0
        %2179 = vmatprep.subr.bf16.mxu0 0
        %2180 = vmatpush1.bf16.msra.mxu0 0
        %2181 = vmatprep.subr.bf16.mxu0 0
        %2182 = vmatpush1.bf16.msra.mxu0 0
        %2183 = vmatprep.subr.bf16.mxu0 0
        %2184 = vmatpush1.bf16.msra.mxu0 0
        %2185 = vmatprep.subr.bf16.mxu0 0
        %2186 = vmatpush1.bf16.msra.mxu0 0
        %2187 = vmatprep.subr.bf16.mxu0 0
        %2188 = vmatpush1.bf16.msra.mxu0 0
        %2189 = vmatprep.subr.bf16.mxu0 0
        %2190 = vmatpush1.bf16.msra.mxu0 0
        %2191 = vmatprep.subr.bf16.mxu0 0
        %2192 = vmatpush1.bf16.msra.mxu0 0
        %2193 = vmatprep.subr.bf16.mxu0 0
        %2194 = vmatpush1.bf16.msra.mxu0 0
        %2195 = vmatprep.subr.bf16.mxu0 0
        %2196 = vmatpush1.bf16.msra.mxu0 0
        %2197 = vmatprep.mubr.bf16.mxu0 0
        %2198 = vmatmul.mubr.bf16.gmra.mrb[0].mxu0 %v2163
        %v2199 = vpop.f32.mrb[0].mxu0
        %v2200 = vadd.f32 %v2148, %v2199
        %v2201 = vpop.f32.mrb[0].mxu0
        %v2202 = vpop.f32.mrb[0].mxu0
        %v2203 = vpop.f32.mrb[0].mxu0
        %2204 = vdwg.mxu0
        %v2205 = vmax.f32 %v2200, 0.0
        %v2206 = vpack.c.bf16 %v2205, %v2205
        %v2207 = vld [vmem:[%s17] sm:$0xf]
        %v2208 = vld [vmem:[%s17 + $0x4] sm:$0xf]
        %v2209 = vld [vmem:[%s17 + $0x8] sm:$0xf]
        %v2210 = vld [vmem:[%s17 + $0xc] sm:$0xf]
        %v2211 = vld [vmem:[%s17 + $0x10] sm:$0xf]
        %v2212 = vld [vmem:[%s17 + $0x14] sm:$0xf]
        %v2213 = vld [vmem:[%s17 + $0x18] sm:$0xf]
        %v2214 = vld [vmem:[%s17 + $0x1c] sm:$0xf]
        %v2215 = vld [vmem:[%s18] sm:$0x1]
        %v2217 = vlaneseq
        %v2218 = vshrl.u32 %v2217, 7
        %v2219 = vsub.s32 0, %v2218
        %v2220 = vrot.slane %v2215, %v2219
        %v2230 = vunpack.c.l.b16 %v2207
        %v2231 = vunpack.c.l.b16 %v2208
        %v2232 = vunpack.c.l.b16 %v2209
        %v2233 = vunpack.c.l.b16 %v2210
        %v2234 = vunpack.c.l.b16 %v2211
        %v2235 = vunpack.c.l.b16 %v2212
        %v2236 = vunpack.c.l.b16 %v2213
        %v2237 = vunpack.c.l.b16 %v2214
        %v2238 = vpack.c.b16 %v2231, %v2230
        %v2239 = vpack.c.b16 %v2233, %v2232
        %v2240 = vpack.c.b16 %v2235, %v2234
        %v2241 = vpack.c.b16 %v2237, %v2236
        %vm2246 = vcmask 523264
        %v2248 = vsel %vm2246, %v2206, 0
        %2250 = vmatprep.subr.bf16.mxu0 0
        %2251 = vmatpush1.bf16.msra.mxu0 %v2238
        %2252 = vmatprep.subr.bf16.mxu0 0
        %2253 = vmatpush1.bf16.msra.mxu0 %v2239
        %2254 = vmatprep.subr.bf16.mxu0 0
        %2255 = vmatpush1.bf16.msra.mxu0 %v2240
        %2256 = vmatprep.subr.bf16.mxu0 0
        %2257 = vmatpush1.bf16.msra.mxu0 %v2241
        %2258 = vmatprep.subr.bf16.mxu0 0
        %2259 = vmatpush1.bf16.msra.mxu0 0
        %2260 = vmatprep.subr.bf16.mxu0 0
        %2261 = vmatpush1.bf16.msra.mxu0 0
        %2262 = vmatprep.subr.bf16.mxu0 0
        %2263 = vmatpush1.bf16.msra.mxu0 0
        %2264 = vmatprep.subr.bf16.mxu0 0
        %2265 = vmatpush1.bf16.msra.mxu0 0
        %2266 = vmatprep.subr.bf16.mxu0 0
        %2267 = vmatpush1.bf16.msra.mxu0 0
        %2268 = vmatprep.subr.bf16.mxu0 0
        %2269 = vmatpush1.bf16.msra.mxu0 0
        %2270 = vmatprep.subr.bf16.mxu0 0
        %2271 = vmatpush1.bf16.msra.mxu0 0
        %2272 = vmatprep.subr.bf16.mxu0 0
        %2273 = vmatpush1.bf16.msra.mxu0 0
        %2274 = vmatprep.subr.bf16.mxu0 0
        %2275 = vmatpush1.bf16.msra.mxu0 0
        %2276 = vmatprep.subr.bf16.mxu0 0
        %2277 = vmatpush1.bf16.msra.mxu0 0
        %2278 = vmatprep.subr.bf16.mxu0 0
        %2279 = vmatpush1.bf16.msra.mxu0 0
        %2280 = vmatprep.subr.bf16.mxu0 0
        %2281 = vmatpush1.bf16.msra.mxu0 0
        %2282 = vmatprep.mubr.bf16.mxu0 0
        %2283 = vmatmul.mubr.bf16.gmra.mrb[0].mxu0 %v2248
        %v2284 = vpop.f32.mrb[0].mxu0
        %v2285 = vadd.f32 %v2220, %v2284
        %v2286 = vpop.f32.mrb[0].mxu0
        %v2287 = vpop.f32.mrb[0].mxu0
        %v2288 = vpop.f32.mrb[0].mxu0
        %2289 = vdwg.mxu0
        %v2290 = vadd.f32 %v2285, %v2108
        %2291 = vst.msk [vmem:[%s593] sm:$0xff] %vm661, %v2290
        %s2292 = sand.u32 %s445, 1
        %s2293 = scalar_lea.sflag [#allocation3], %s2292
        %s2294 = sand.u32 %s445, 1
        %s2295 = smul.addr %s2294, 8
        %s2296 = scalar_lea.vmem [#allocation2], %s2295
        // Predicated region
        $region97: #{tpu_custom_call.1} parent=95 // pred_check
          %p2297 = pneg %p455
        $region98: #{tpu_custom_call.1} parent=95 // pred_check_branch
          %2299 = sbr.rel (%p2297) target = $region100
        $region99: #{tpu_custom_call.1} parent=95 // pred_region
          %s2301 = ssub.s32 128, 128
          %2302 = vsyncadd %s2293, %s2301
          %s2303 = smul.addr %s33, 128
          %s2304 = scalar_lea.hbm %s19, %s2303
          %s2306 = sshll.u32 %s2296, 4
          %s2307 = int_to_ptr.vmem [resolvable:$true] %s2306
          %2309 = dma.vmem_to_hbm [thread:$0]  %s2307, 128, %s2304, %s2293
        $region100: #{tpu_custom_call.1} parent=95 // pred_fallthru
          _
      $region96: #{tpu_custom_call.1} parent=5 // pred_fallthru
        _
      %p2310 = scmp.le.s32.totalorder 2, %s28
      // Predicated region
      $region101: #{tpu_custom_call.1} parent=5 // pred_check
        %p2311 = pneg %p2310
      $region102: #{tpu_custom_call.1} parent=5 // pred_check_branch
        %2313 = sbr.rel (%p2311) target = $region104
      $region103: #{tpu_custom_call.1} parent=5 // pred_region
        %s2314 = ssub.s32 %s28, 2
        // Predicated region
        $region105: #{tpu_custom_call.1} parent=103 // pred_check
          %p2315 = pneg %p461
        $region106: #{tpu_custom_call.1} parent=103 // pred_check_branch
          %2317 = sbr.rel (%p2315) target = $region108
        $region107: #{tpu_custom_call.1} parent=103 // pred_region
          %s2318 = sand.u32 %s446, 1
          %s2319 = scalar_lea.sflag [#allocation3], %s2318
          %s2320 = sand.u32 %s446, 1
          %s2321 = smul.addr %s2320, 8
          %s2322 = scalar_lea.vmem [#allocation2], %s2321
          %2323 = dma.done %s2319, 128
        $region108: #{tpu_custom_call.1} parent=103 // pred_fallthru
          _
      $region104: #{tpu_custom_call.1} parent=5 // pred_fallthru
        _
    $region6: #{tpu_custom_call.1} parent=1 // loop_footer
      %s32 = sadd.s32 1, %s28
    $region7: #{tpu_custom_call.1} parent=1 // loop_footer_branch
      %27 = sbr.rel target = $region3
    $region8: #{tpu_custom_call.1} parent=1 // loop_exit
      _
    %2324 = vsyncpa [#allocation3], 1
    %s2325 = scalar_lea.sflag [#allocation3], 1
    %2326 = vsyncpa %s2325, 1

</llo_original>
